<compile_context>
chip_gen: v5e
topology: v5e:2x2
jax: 0.10.0
libtpu: 0.0.40
codegen_flags: <defaults>
</compile_context>

<pallas_src>
import jax
import jax.numpy as jnp
from jax.experimental import pallas as pl
from jax.experimental.pallas import tpu as pltpu

KERNEL_SIZES = (3, 4, 5)


def _round_up(x, m):
    return (x + m - 1) // m * m


def textcnn_kernel(x_ref, w3_ref, b3_ref, w4_ref, b4_ref, w5_ref, b5_ref,
                   wfc_ref, bfc_ref, o_ref):
    """x_ref: (TB, L, E) bf16.  w{k}_ref: (k*E, Fp) bf16.  b{k}_ref: (1, Fp) f32.
    wfc_ref: (3*Fp, Cp) bf16.  bfc_ref: (1, Cp) f32.  o_ref: (TB, Cp) f32."""
    x = x_ref[...]                                   # (TB, L, E) bf16
    TB, L, E = x.shape

    feats = []
    for w_ref, b_ref, k in ((w3_ref, b3_ref, 3),
                            (w4_ref, b4_ref, 4),
                            (w5_ref, b5_ref, 5)):
        Lout = L - k + 1
        Fp = w_ref.shape[-1]
        # im2col: stack the k shifted windows along the embed axis -> one deep matmul.
        # TODO(synk): pad/align Lout to a multiple of 8 (masked max) to avoid unaligned
        # sublane slices for odd Lout.
        cols = jnp.concatenate([x[:, j:j + Lout, :] for j in range(k)], axis=-1)
        y = jnp.dot(cols.reshape(TB * Lout, k * E), w_ref[...],
                    preferred_element_type=jnp.float32)       # (TB*Lout, Fp) f32
        m = jnp.max(y.reshape(TB, Lout, Fp), axis=1)          # max over time -> (TB, Fp)
        # bias + ReLU hoisted past the max (bias time-invariant, ReLU monotone).
        feats.append(jnp.maximum(m + b_ref[...], 0.0))

    h = jnp.concatenate(feats, axis=1)                        # (TB, 3*Fp), 128-lane blocks
    # dropout(p=0.5) is identity at inference (eval mode).
    logits = jnp.dot(h.astype(jnp.bfloat16), wfc_ref[...],
                     preferred_element_type=jnp.float32) + bfc_ref[...]
    o_ref[...] = logits.astype(o_ref.dtype)


def textcnn_forward(token_ids, params, *, tb=None):
    """token_ids: (B, L) int32.  Returns logits (B, num_classes) f32."""
    emb = params["embedding"]
    B, L = token_ids.shape
    E = emb.shape[1]
    F = params["b3"].shape[-1]
    C = params["fc_b"].shape[-1]

    Fp = _round_up(F, 128)                    # lane-dense filter dim
    Cp = _round_up(C, 128)                    # lane-dense logits dim
    TB = tb if tb is not None else min(64, _round_up(B, 8))
    Bp = _round_up(B, TB)

    # Embedding gather (glue) + bf16 cast (halves HBM traffic of the dominant buffer).
    # TODO(synk): fuse the gather into the kernel (scalar-prefetch token ids + DMA-gather
    # rows from an HBM-resident table) to remove the x_emb HBM round-trip.
    x_emb = jnp.take(emb, token_ids, axis=0).astype(jnp.bfloat16)      # (B, L, E)
    if Bp != B:
        x_emb = jnp.pad(x_emb, ((0, Bp - B), (0, 0), (0, 0)))

    def pad_conv(k):
        w = params[f"w{k}"]                                             # (k, E, F)
        b = params[f"b{k}"]                                             # (1, F)
        wp = jnp.pad(w, ((0, 0), (0, 0), (0, Fp - F)))
        wp = wp.reshape(k * E, Fp).astype(jnp.bfloat16)                 # matches im2col order
        bp = jnp.pad(b, ((0, 0), (0, Fp - F))).astype(jnp.float32)
        return wp, bp

    w3, b3 = pad_conv(3)
    w4, b4 = pad_conv(4)
    w5, b5 = pad_conv(5)

    # fc weight scattered into the lane-padded (3*Fp, Cp) layout so row blocks line up
    # with the padded per-k feature blocks; padded rows/cols are zero.
    wfc = jnp.zeros((3 * Fp, Cp), jnp.float32)
    for i in range(3):
        wfc = wfc.at[i * Fp:i * Fp + F, :C].set(params["fc_w"][i * F:(i + 1) * F, :])
    wfc = wfc.astype(jnp.bfloat16)
    bfc = jnp.pad(params["fc_b"], ((0, 0), (0, Cp - C))).astype(jnp.float32)

    const = lambda shape: pl.BlockSpec(shape, lambda b: (0, 0))          # weights: resident

    logits = pl.pallas_call(
        textcnn_kernel,
        out_shape=jax.ShapeDtypeStruct((Bp, Cp), jnp.float32),
        grid_spec=pltpu.PrefetchScalarGridSpec(
            num_scalar_prefetch=0,
            grid=(Bp // TB,),
            in_specs=[
                pl.BlockSpec((TB, L, E), lambda b: (b, 0, 0)),           # activations: tiled
                const((3 * E, Fp)), const((1, Fp)),
                const((4 * E, Fp)), const((1, Fp)),
                const((5 * E, Fp)), const((1, Fp)),
                const((3 * Fp, Cp)), const((1, Cp)),
            ],
            out_specs=pl.BlockSpec((TB, Cp), lambda b: (b, 0)),
        ),
        compiler_params=pltpu.CompilerParams(
            dimension_semantics=("parallel",),                           # megacore / v7x 2-TC
            vmem_limit_bytes=32 * 1024 * 1024,                           # safe on v5e/v6e/v7x
        ),
    )(x_emb, w3, b3, w4, b4, w5, b5, wfc, bfc)

    return logits[:B, :C]


def make_params(key, vocab_size, embed_dim, num_classes, num_filters):
    ks = jax.random.split(key, 9)
    emb = 0.1 * jax.random.normal(ks[0], (vocab_size, embed_dim), jnp.float32)
    emb = emb.at[0].set(0.0)                          # padding_idx=0
    params = {"embedding": emb}
    for i, k in enumerate(KERNEL_SIZES):
        params[f"w{k}"] = 0.1 * jax.random.normal(
            ks[1 + 2 * i], (k, embed_dim, num_filters), jnp.float32)
        params[f"b{k}"] = 0.1 * jax.random.normal(
            ks[2 + 2 * i], (1, num_filters), jnp.float32)
    params["fc_w"] = 0.1 * jax.random.normal(
        ks[7], (len(KERNEL_SIZES) * num_filters, num_classes), jnp.float32)
    params["fc_b"] = 0.1 * jax.random.normal(ks[8], (1, num_classes), jnp.float32)
    return params


def textcnn_reference(token_ids, params, cast_bf16=False):
    """Pure-JAX reference matching the PyTorch forward (eval mode).
    cast_bf16=True quantizes the matmul operands to bf16 (like the kernel) for a tight check."""
    q = (lambda a: a.astype(jnp.bfloat16).astype(jnp.float32)) if cast_bf16 else (lambda a: a)
    x = q(jnp.take(params["embedding"], token_ids, axis=0))              # (B, L, E)
    feats = []
    for k in KERNEL_SIZES:
        w, b = q(params[f"w{k}"]), params[f"b{k}"]                       # (k,E,F), (1,F)
        L = x.shape[1]
        Lout = L - k + 1
        acc = sum(jnp.einsum("ble,ef->blf", x[:, j:j + Lout, :], w[j])
                  for j in range(k)) + b[None, :, :]
        feats.append(jnp.max(jax.nn.relu(acc), axis=1))
    h = q(jnp.concatenate(feats, axis=1))
    return h @ q(params["fc_w"]) + params["fc_b"]


if __name__ == "__main__":
    vocab_size, embed_dim, num_classes, num_filters = 50, 32, 4, 16
    B, L = 6, 16   # L must be >= max(kernel_sizes); B deliberately non-multiple of 8

    key = jax.random.PRNGKey(0)
    pkey, tkey = jax.random.split(key)
    params = make_params(pkey, vocab_size, embed_dim, num_classes, num_filters)
    tokens = jax.random.randint(tkey, (B, L), 0, vocab_size, dtype=jnp.int32)

    fwd = jax.jit(textcnn_forward)
    out = jax.block_until_ready(fwd(tokens, params))

    ref_bf16 = textcnn_reference(tokens, params, cast_bf16=True)   # same bf16 operands
    ref_f32 = textcnn_reference(tokens, params, cast_bf16=False)   # pure f32 PyTorch-equivalent

    assert out.shape == (B, num_classes)
    assert jnp.allclose(out, ref_bf16, rtol=2e-3, atol=2e-3)
    assert jnp.allclose(out, ref_f32, rtol=2e-2, atol=2e-2)
    print("KERNEL_OK")
</pallas_src>

<mosaic_0001>
module attributes {stable_mosaic.version = 11 : i64} {
  func.func @textcnn_kernel(%arg0: i32, %arg1: memref<8x16x32xbf16, #tpu.memory_space<vmem>>, %arg2: memref<96x128xbf16, #tpu.memory_space<vmem>>, %arg3: memref<1x128xf32, #tpu.memory_space<vmem>>, %arg4: memref<128x128xbf16, #tpu.memory_space<vmem>>, %arg5: memref<1x128xf32, #tpu.memory_space<vmem>>, %arg6: memref<160x128xbf16, #tpu.memory_space<vmem>>, %arg7: memref<1x128xf32, #tpu.memory_space<vmem>>, %arg8: memref<384x128xbf16, #tpu.memory_space<vmem>>, %arg9: memref<1x128xf32, #tpu.memory_space<vmem>>, %arg10: memref<8x128xf32, #tpu.memory_space<vmem>>) attributes {dimension_semantics = [#tpu.dimension_semantics<parallel>], iteration_bounds = array<i64: 1>, scalar_prefetch = 0 : i64, scratch_operands = 0 : i64, tpu.core_type = #tpu.core_type<tc>, window_params = [{transform_indices = @transform_0, window_bounds = array<i64: 8, 16, 32>}, {pipeline_mode = #tpu.pipeline_mode<synchronous>, transform_indices = @transform_1, window_bounds = array<i64: 96, 128>}, {pipeline_mode = #tpu.pipeline_mode<synchronous>, transform_indices = @transform_2, window_bounds = array<i64: 1, 128>}, {pipeline_mode = #tpu.pipeline_mode<synchronous>, transform_indices = @transform_3, window_bounds = array<i64: 128, 128>}, {pipeline_mode = #tpu.pipeline_mode<synchronous>, transform_indices = @transform_4, window_bounds = array<i64: 1, 128>}, {pipeline_mode = #tpu.pipeline_mode<synchronous>, transform_indices = @transform_5, window_bounds = array<i64: 160, 128>}, {pipeline_mode = #tpu.pipeline_mode<synchronous>, transform_indices = @transform_6, window_bounds = array<i64: 1, 128>}, {pipeline_mode = #tpu.pipeline_mode<synchronous>, transform_indices = @transform_7, window_bounds = array<i64: 384, 128>}, {pipeline_mode = #tpu.pipeline_mode<synchronous>, transform_indices = @transform_8, window_bounds = array<i64: 1, 128>}, {transform_indices = @transform_9, window_bounds = array<i64: 8, 128>}]} {
    %c0 = arith.constant 0 : index
    %c0_0 = arith.constant 0 : index
    %c0_1 = arith.constant 0 : index
    %0 = vector.load %arg1[%c0, %c0_0, %c0_1] : memref<8x16x32xbf16, #tpu.memory_space<vmem>>, vector<8x16x32xbf16>
    %1 = vector.extract_strided_slice %0 {offsets = [0, 0, 0], sizes = [8, 14, 32], strides = [1, 1, 1]} : vector<8x16x32xbf16> to vector<8x14x32xbf16>
    %2 = vector.extract_strided_slice %0 {offsets = [0, 1, 0], sizes = [8, 14, 32], strides = [1, 1, 1]} : vector<8x16x32xbf16> to vector<8x14x32xbf16>
    %3 = vector.extract_strided_slice %0 {offsets = [0, 2, 0], sizes = [8, 14, 32], strides = [1, 1, 1]} : vector<8x16x32xbf16> to vector<8x14x32xbf16>
    %4 = tpu.concatenate %1, %2, %3 in 2 : vector<8x14x32xbf16>, vector<8x14x32xbf16>, vector<8x14x32xbf16> -> vector<8x14x96xbf16>
    %5 = vector.shape_cast %4 : vector<8x14x96xbf16> to vector<112x96xbf16>
    %c0_2 = arith.constant 0 : index
    %c0_3 = arith.constant 0 : index
    %6 = vector.load %arg2[%c0_2, %c0_3] : memref<96x128xbf16, #tpu.memory_space<vmem>>, vector<96x128xbf16>
    %cst = arith.constant dense<0.000000e+00> : vector<112x128xf32>
    %7 = tpu.matmul %5, %6, %cst {dimension_numbers = #tpu.dot_dimension_numbers<[1], [0], [0], [1], [0, 0, 1, 1], [], []>} : vector<112x96xbf16>, vector<96x128xbf16>, vector<112x128xf32> -> vector<112x128xf32>
    %8 = vector.shape_cast %7 : vector<112x128xf32> to vector<8x14x128xf32>
    %cst_4 = arith.constant dense<0xFF800000> : vector<8x128xf32>
    %9 = vector.multi_reduction <maximumf>, %8, %cst_4 [1] : vector<8x14x128xf32> to vector<8x128xf32>
    %c0_5 = arith.constant 0 : index
    %c0_6 = arith.constant 0 : index
    %10 = vector.load %arg3[%c0_5, %c0_6] : memref<1x128xf32, #tpu.memory_space<vmem>>, vector<1x128xf32>
    %11 = vector.broadcast %10 : vector<1x128xf32> to vector<8x128xf32>
    %12 = arith.addf %9, %11 : vector<8x128xf32>
    %cst_7 = arith.constant 0.000000e+00 : f32
    %13 = vector.broadcast %cst_7 : f32 to vector<8x128xf32>
    %14 = arith.maximumf %12, %13 : vector<8x128xf32>
    %15 = vector.extract_strided_slice %0 {offsets = [0, 0, 0], sizes = [8, 13, 32], strides = [1, 1, 1]} : vector<8x16x32xbf16> to vector<8x13x32xbf16>
    %16 = vector.extract_strided_slice %0 {offsets = [0, 1, 0], sizes = [8, 13, 32], strides = [1, 1, 1]} : vector<8x16x32xbf16> to vector<8x13x32xbf16>
    %17 = vector.extract_strided_slice %0 {offsets = [0, 2, 0], sizes = [8, 13, 32], strides = [1, 1, 1]} : vector<8x16x32xbf16> to vector<8x13x32xbf16>
    %18 = vector.extract_strided_slice %0 {offsets = [0, 3, 0], sizes = [8, 13, 32], strides = [1, 1, 1]} : vector<8x16x32xbf16> to vector<8x13x32xbf16>
    %19 = tpu.concatenate %15, %16, %17, %18 in 2 : vector<8x13x32xbf16>, vector<8x13x32xbf16>, vector<8x13x32xbf16>, vector<8x13x32xbf16> -> vector<8x13x128xbf16>
    %20 = vector.shape_cast %19 : vector<8x13x128xbf16> to vector<104x128xbf16>
    %c0_8 = arith.constant 0 : index
    %c0_9 = arith.constant 0 : index
    %21 = vector.load %arg4[%c0_8, %c0_9] : memref<128x128xbf16, #tpu.memory_space<vmem>>, vector<128x128xbf16>
    %cst_10 = arith.constant dense<0.000000e+00> : vector<104x128xf32>
    %22 = tpu.matmul %20, %21, %cst_10 {dimension_numbers = #tpu.dot_dimension_numbers<[1], [0], [0], [1], [0, 0, 1, 1], [], []>} : vector<104x128xbf16>, vector<128x128xbf16>, vector<104x128xf32> -> vector<104x128xf32>
    %23 = vector.shape_cast %22 : vector<104x128xf32> to vector<8x13x128xf32>
    %cst_11 = arith.constant dense<0xFF800000> : vector<8x128xf32>
    %24 = vector.multi_reduction <maximumf>, %23, %cst_11 [1] : vector<8x13x128xf32> to vector<8x128xf32>
    %c0_12 = arith.constant 0 : index
    %c0_13 = arith.constant 0 : index
    %25 = vector.load %arg5[%c0_12, %c0_13] : memref<1x128xf32, #tpu.memory_space<vmem>>, vector<1x128xf32>
    %26 = vector.broadcast %25 : vector<1x128xf32> to vector<8x128xf32>
    %27 = arith.addf %24, %26 : vector<8x128xf32>
    %cst_14 = arith.constant 0.000000e+00 : f32
    %28 = vector.broadcast %cst_14 : f32 to vector<8x128xf32>
    %29 = arith.maximumf %27, %28 : vector<8x128xf32>
    %30 = vector.extract_strided_slice %0 {offsets = [0, 0, 0], sizes = [8, 12, 32], strides = [1, 1, 1]} : vector<8x16x32xbf16> to vector<8x12x32xbf16>
    %31 = vector.extract_strided_slice %0 {offsets = [0, 1, 0], sizes = [8, 12, 32], strides = [1, 1, 1]} : vector<8x16x32xbf16> to vector<8x12x32xbf16>
    %32 = vector.extract_strided_slice %0 {offsets = [0, 2, 0], sizes = [8, 12, 32], strides = [1, 1, 1]} : vector<8x16x32xbf16> to vector<8x12x32xbf16>
    %33 = vector.extract_strided_slice %0 {offsets = [0, 3, 0], sizes = [8, 12, 32], strides = [1, 1, 1]} : vector<8x16x32xbf16> to vector<8x12x32xbf16>
    %34 = vector.extract_strided_slice %0 {offsets = [0, 4, 0], sizes = [8, 12, 32], strides = [1, 1, 1]} : vector<8x16x32xbf16> to vector<8x12x32xbf16>
    %35 = tpu.concatenate %30, %31, %32, %33, %34 in 2 : vector<8x12x32xbf16>, vector<8x12x32xbf16>, vector<8x12x32xbf16>, vector<8x12x32xbf16>, vector<8x12x32xbf16> -> vector<8x12x160xbf16>
    %36 = vector.shape_cast %35 : vector<8x12x160xbf16> to vector<96x160xbf16>
    %c0_15 = arith.constant 0 : index
    %c0_16 = arith.constant 0 : index
    %37 = vector.load %arg6[%c0_15, %c0_16] : memref<160x128xbf16, #tpu.memory_space<vmem>>, vector<160x128xbf16>
    %cst_17 = arith.constant dense<0.000000e+00> : vector<96x128xf32>
    %38 = tpu.matmul %36, %37, %cst_17 {dimension_numbers = #tpu.dot_dimension_numbers<[1], [0], [0], [1], [0, 0, 1, 1], [], []>} : vector<96x160xbf16>, vector<160x128xbf16>, vector<96x128xf32> -> vector<96x128xf32>
    %39 = vector.shape_cast %38 : vector<96x128xf32> to vector<8x12x128xf32>
    %cst_18 = arith.constant dense<0xFF800000> : vector<8x128xf32>
    %40 = vector.multi_reduction <maximumf>, %39, %cst_18 [1] : vector<8x12x128xf32> to vector<8x128xf32>
    %c0_19 = arith.constant 0 : index
    %c0_20 = arith.constant 0 : index
    %41 = vector.load %arg7[%c0_19, %c0_20] : memref<1x128xf32, #tpu.memory_space<vmem>>, vector<1x128xf32>
    %42 = vector.broadcast %41 : vector<1x128xf32> to vector<8x128xf32>
    %43 = arith.addf %40, %42 : vector<8x128xf32>
    %cst_21 = arith.constant 0.000000e+00 : f32
    %44 = vector.broadcast %cst_21 : f32 to vector<8x128xf32>
    %45 = arith.maximumf %43, %44 : vector<8x128xf32>
    %46 = tpu.concatenate %14, %29, %45 in 1 : vector<8x128xf32>, vector<8x128xf32>, vector<8x128xf32> -> vector<8x384xf32>
    %47 = arith.truncf %46 : vector<8x384xf32> to vector<8x384xbf16>
    %c0_22 = arith.constant 0 : index
    %c0_23 = arith.constant 0 : index
    %48 = vector.load %arg8[%c0_22, %c0_23] : memref<384x128xbf16, #tpu.memory_space<vmem>>, vector<384x128xbf16>
    %cst_24 = arith.constant dense<0.000000e+00> : vector<8x128xf32>
    %49 = tpu.matmul %47, %48, %cst_24 {dimension_numbers = #tpu.dot_dimension_numbers<[1], [0], [0], [1], [0, 0, 1, 1], [], []>} : vector<8x384xbf16>, vector<384x128xbf16>, vector<8x128xf32> -> vector<8x128xf32>
    %c0_25 = arith.constant 0 : index
    %c0_26 = arith.constant 0 : index
    %50 = vector.load %arg9[%c0_25, %c0_26] : memref<1x128xf32, #tpu.memory_space<vmem>>, vector<1x128xf32>
    %51 = vector.broadcast %50 : vector<1x128xf32> to vector<8x128xf32>
    %52 = arith.addf %49, %51 : vector<8x128xf32>
    %c0_27 = arith.constant 0 : index
    %c0_28 = arith.constant 0 : index
    %53 = vector.load %arg10[%c0_27, %c0_28] : memref<8x128xf32, #tpu.memory_space<vmem>>, vector<8x128xf32>
    tpu.vector_store %arg10[%c0_27, %c0_28], %52 {strides = array<i32>} : memref<8x128xf32, #tpu.memory_space<vmem>>, vector<8x128xf32>,
    return
  }
  func.func @transform_0(%arg0: i32) -> (i32, i32, i32) {
    %c0_i32 = arith.constant 0 : i32
    %c0_i32_0 = arith.constant 0 : i32
    %c0_i32_1 = arith.constant 0 : i32
    return %arg0, %c0_i32, %c0_i32_0 : i32, i32, i32
  }
  func.func @transform_1(%arg0: i32) -> (i32, i32) {
    %c0_i32 = arith.constant 0 : i32
    %c0_i32_0 = arith.constant 0 : i32
    %c0_i32_1 = arith.constant 0 : i32
    return %c0_i32, %c0_i32_0 : i32, i32
  }
  func.func @transform_2(%arg0: i32) -> (i32, i32) {
    %c0_i32 = arith.constant 0 : i32
    %c0_i32_0 = arith.constant 0 : i32
    %c0_i32_1 = arith.constant 0 : i32
    return %c0_i32, %c0_i32_0 : i32, i32
  }
  func.func @transform_3(%arg0: i32) -> (i32, i32) {
    %c0_i32 = arith.constant 0 : i32
    %c0_i32_0 = arith.constant 0 : i32
    %c0_i32_1 = arith.constant 0 : i32
    return %c0_i32, %c0_i32_0 : i32, i32
  }
  func.func @transform_4(%arg0: i32) -> (i32, i32) {
    %c0_i32 = arith.constant 0 : i32
    %c0_i32_0 = arith.constant 0 : i32
    %c0_i32_1 = arith.constant 0 : i32
    return %c0_i32, %c0_i32_0 : i32, i32
  }
  func.func @transform_5(%arg0: i32) -> (i32, i32) {
    %c0_i32 = arith.constant 0 : i32
    %c0_i32_0 = arith.constant 0 : i32
    %c0_i32_1 = arith.constant 0 : i32
    return %c0_i32, %c0_i32_0 : i32, i32
  }
  func.func @transform_6(%arg0: i32) -> (i32, i32) {
    %c0_i32 = arith.constant 0 : i32
    %c0_i32_0 = arith.constant 0 : i32
    %c0_i32_1 = arith.constant 0 : i32
    return %c0_i32, %c0_i32_0 : i32, i32
  }
  func.func @transform_7(%arg0: i32) -> (i32, i32) {
    %c0_i32 = arith.constant 0 : i32
    %c0_i32_0 = arith.constant 0 : i32
    %c0_i32_1 = arith.constant 0 : i32
    return %c0_i32, %c0_i32_0 : i32, i32
  }
  func.func @transform_8(%arg0: i32) -> (i32, i32) {
    %c0_i32 = arith.constant 0 : i32
    %c0_i32_0 = arith.constant 0 : i32
    %c0_i32_1 = arith.constant 0 : i32
    return %c0_i32, %c0_i32_0 : i32, i32
  }
  func.func @transform_9(%arg0: i32) -> (i32, i32) {
    %c0_i32 = arith.constant 0 : i32
    %c0_i32_0 = arith.constant 0 : i32
    return %arg0, %c0_i32 : i32, i32
  }
}

</mosaic_0001>

<llo_original>
// kernel: textcnn_forward.1
$region0: #{textcnn_forward.1}
  #allocation0 [shape = 'u32[]', space=smem, size = 0x4, offset = 0x4, fixed_abs, tag = 'smem constant byte address 0x4 - core index']
  #allocation1 [shape = 'u32[72,128]{1,0:T(1,128)}', space=vmem, size = 0x9000, scoped, tag = 'internal scratch']
  %s0 = inlined_call_operand.vmem [shape: bf16[8,16,32], index: 0, kind: input, shape index: {}]
  %s1 = inlined_call_operand.vmem [shape: bf16[96,128], index: 1, kind: input, shape index: {}]
  %s2 = inlined_call_operand.vmem [shape: f32[1,128], index: 2, kind: input, shape index: {}]
  %s3 = inlined_call_operand.vmem [shape: bf16[128,128], index: 3, kind: input, shape index: {}]
  %s4 = inlined_call_operand.vmem [shape: f32[1,128], index: 4, kind: input, shape index: {}]
  %s5 = inlined_call_operand.vmem [shape: bf16[160,128], index: 5, kind: input, shape index: {}]
  %s6 = inlined_call_operand.vmem [shape: f32[1,128], index: 6, kind: input, shape index: {}]
  %s7 = inlined_call_operand.vmem [shape: bf16[384,128], index: 7, kind: input, shape index: {}]
  %s8 = inlined_call_operand.vmem [shape: f32[1,128], index: 8, kind: input, shape index: {}]
  %s9 = inlined_call_operand.vmem [shape: f32[8,128], index: 9, kind: output, shape index: {}]
  %s10 = sld [smem:[#allocation0]]
  $region46: #{textcnn_forward.1} parent=0
    _
  %s12 = ssub.s32 1, %s10
  %s13 = scalar_select 0, %s12, %s10
  // Predicated region
  $region2: #{textcnn_forward.1} parent=0 // pred_check
    _
  $region3: #{textcnn_forward.1} parent=0 // pred_check_branch
    %15 = sbr.rel (0) target = $region5
  $region4: #{textcnn_forward.1} parent=0 // pred_region
    _
  $region5: #{textcnn_forward.1} parent=0 // pred_fallthru
    _
  // Predicated region
  $region6: #{textcnn_forward.1} parent=0 // pred_check
    _
  $region7: #{textcnn_forward.1} parent=0 // pred_check_branch
    %17 = sbr.rel (0) target = $region9
  $region8: #{textcnn_forward.1} parent=0 // pred_region
    _
  $region9: #{textcnn_forward.1} parent=0 // pred_fallthru
    _
  // Predicated region
  $region10: #{textcnn_forward.1} parent=0 // pred_check
    _
  $region11: #{textcnn_forward.1} parent=0 // pred_check_branch
    %19 = sbr.rel (0) target = $region13
  $region12: #{textcnn_forward.1} parent=0 // pred_region
    _
  $region13: #{textcnn_forward.1} parent=0 // pred_fallthru
    _
  // Predicated region
  $region14: #{textcnn_forward.1} parent=0 // pred_check
    _
  $region15: #{textcnn_forward.1} parent=0 // pred_check_branch
    %21 = sbr.rel (0) target = $region17
  $region16: #{textcnn_forward.1} parent=0 // pred_region
    _
  $region17: #{textcnn_forward.1} parent=0 // pred_fallthru
    _
  // Predicated region
  $region18: #{textcnn_forward.1} parent=0 // pred_check
    _
  $region19: #{textcnn_forward.1} parent=0 // pred_check_branch
    %23 = sbr.rel (0) target = $region21
  $region20: #{textcnn_forward.1} parent=0 // pred_region
    _
  $region21: #{textcnn_forward.1} parent=0 // pred_fallthru
    _
  // Predicated region
  $region22: #{textcnn_forward.1} parent=0 // pred_check
    _
  $region23: #{textcnn_forward.1} parent=0 // pred_check_branch
    %25 = sbr.rel (0) target = $region25
  $region24: #{textcnn_forward.1} parent=0 // pred_region
    _
  $region25: #{textcnn_forward.1} parent=0 // pred_fallthru
    _
  // Predicated region
  $region26: #{textcnn_forward.1} parent=0 // pred_check
    _
  $region27: #{textcnn_forward.1} parent=0 // pred_check_branch
    %27 = sbr.rel (0) target = $region29
  $region28: #{textcnn_forward.1} parent=0 // pred_region
    _
  $region29: #{textcnn_forward.1} parent=0 // pred_fallthru
    _
  // Predicated region
  $region30: #{textcnn_forward.1} parent=0 // pred_check
    _
  $region31: #{textcnn_forward.1} parent=0 // pred_check_branch
    %29 = sbr.rel (0) target = $region33
  $region32: #{textcnn_forward.1} parent=0 // pred_region
    _
  $region33: #{textcnn_forward.1} parent=0 // pred_fallthru
    _
  // Predicated region
  $region34: #{textcnn_forward.1} parent=0 // pred_check
    _
  $region35: #{textcnn_forward.1} parent=0 // pred_check_branch
    %31 = sbr.rel (0) target = $region37
  $region36: #{textcnn_forward.1} parent=0 // pred_region
    _
  $region37: #{textcnn_forward.1} parent=0 // pred_fallthru
    _
  %v33 = vld [vmem:[%s0] sm:$0xf]
  %v34 = vld [vmem:[%s0 + $0x4] sm:$0xf]
  %v35 = vld [vmem:[%s0 + $0x8] sm:$0xf]
  %v36 = vld [vmem:[%s0 + $0xc] sm:$0xf]
  %v37 = vld [vmem:[%s0 + $0x10] sm:$0xf]
  %v38 = vld [vmem:[%s0 + $0x14] sm:$0xf]
  %v39 = vld [vmem:[%s0 + $0x18] sm:$0xf]
  %v40 = vld [vmem:[%s0 + $0x1c] sm:$0xf]
  %v41 = vld [vmem:[%s0 + $0x20] sm:$0xf]
  %v42 = vld [vmem:[%s0 + $0x24] sm:$0xf]
  %v43 = vld [vmem:[%s0 + $0x28] sm:$0xf]
  %v44 = vld [vmem:[%s0 + $0x2c] sm:$0xf]
  %v45 = vld [vmem:[%s0 + $0x30] sm:$0xf]
  %v46 = vld [vmem:[%s0 + $0x34] sm:$0xf]
  %v47 = vld [vmem:[%s0 + $0x38] sm:$0xf]
  %v48 = vld [vmem:[%s0 + $0x3c] sm:$0xf]
  %v65 = vunpack.c.l.b16 %v33
  %v66 = vunpack.c.l.b16 %v34
  %v67 = vunpack.c.l.b16 %v35
  %v68 = vunpack.c.l.b16 %v36
  %v69 = vunpack.c.l.b16 %v37
  %v70 = vunpack.c.l.b16 %v38
  %v71 = vunpack.c.l.b16 %v39
  %v72 = vunpack.c.l.b16 %v40
  %v73 = vunpack.c.l.b16 %v41
  %v74 = vunpack.c.l.b16 %v42
  %v75 = vunpack.c.l.b16 %v43
  %v76 = vunpack.c.l.b16 %v44
  %v77 = vunpack.c.l.b16 %v45
  %v78 = vunpack.c.l.b16 %v46
  %v79 = vunpack.c.l.b16 %v47
  %v80 = vunpack.c.l.b16 %v48
  %v81 = vpack.c.b16 %v66, %v65
  %v82 = vpack.c.b16 %v68, %v67
  %v83 = vpack.c.b16 %v70, %v69
  %v84 = vpack.c.b16 %v72, %v71
  %v85 = vpack.c.b16 %v74, %v73
  %v86 = vpack.c.b16 %v76, %v75
  %v87 = vpack.c.b16 %v78, %v77
  %v88 = vpack.c.b16 %v80, %v79
  %v90 = vshrl.u32 %v81, 16
  %v92 = vshll.u32 %v81, 16
  %v94 = vrot.slane %v92, 1
  %v95 = vor.u32 %v90, %v94
  %v97 = vshrl.u32 %v82, 16
  %v99 = vshll.u32 %v82, 16
  %v101 = vrot.slane %v99, 1
  %v102 = vor.u32 %v97, %v101
  %v104 = vshrl.u32 %v83, 16
  %v106 = vshll.u32 %v83, 16
  %v108 = vrot.slane %v106, 1
  %v109 = vor.u32 %v104, %v108
  %v111 = vshrl.u32 %v84, 16
  %v113 = vshll.u32 %v84, 16
  %v115 = vrot.slane %v113, 1
  %v116 = vor.u32 %v111, %v115
  %v118 = vshrl.u32 %v85, 16
  %v120 = vshll.u32 %v85, 16
  %v122 = vrot.slane %v120, 1
  %v123 = vor.u32 %v118, %v122
  %v125 = vshrl.u32 %v86, 16
  %v127 = vshll.u32 %v86, 16
  %v129 = vrot.slane %v127, 1
  %v130 = vor.u32 %v125, %v129
  %v132 = vshrl.u32 %v87, 16
  %v134 = vshll.u32 %v87, 16
  %v136 = vrot.slane %v134, 1
  %v137 = vor.u32 %v132, %v136
  %v139 = vshrl.u32 %v88, 16
  %v141 = vshll.u32 %v88, 16
  %v143 = vrot.slane %v141, 1
  %v144 = vor.u32 %v139, %v143
  %145 = vrot.lane.b32.xlu0 %v95, 32
  %v146 = vpop.permute.xlu0 %145
  %147 = vrot.lane.b32.xlu0 %v102, 32
  %v148 = vpop.permute.xlu0 %147
  %149 = vrot.lane.b32.xlu0 %v109, 32
  %v150 = vpop.permute.xlu0 %149
  %151 = vrot.lane.b32.xlu0 %v116, 32
  %v152 = vpop.permute.xlu0 %151
  %153 = vrot.lane.b32.xlu0 %v123, 32
  %v154 = vpop.permute.xlu0 %153
  %155 = vrot.lane.b32.xlu0 %v130, 32
  %v156 = vpop.permute.xlu0 %155
  %157 = vrot.lane.b32.xlu0 %v137, 32
  %v158 = vpop.permute.xlu0 %157
  %159 = vrot.lane.b32.xlu0 %v144, 32
  %v160 = vpop.permute.xlu0 %159
  %v161 = vrot.slane %v81, 1
  %v162 = vrot.slane %v82, 1
  %v163 = vrot.slane %v83, 1
  %v164 = vrot.slane %v84, 1
  %v165 = vrot.slane %v85, 1
  %v166 = vrot.slane %v86, 1
  %v167 = vrot.slane %v87, 1
  %v168 = vrot.slane %v88, 1
  %169 = vrot.lane.b32.xlu0 %v161, 64
  %v170 = vpop.permute.xlu0 %169
  %171 = vrot.lane.b32.xlu0 %v162, 64
  %v172 = vpop.permute.xlu0 %171
  %173 = vrot.lane.b32.xlu0 %v163, 64
  %v174 = vpop.permute.xlu0 %173
  %175 = vrot.lane.b32.xlu0 %v164, 64
  %v176 = vpop.permute.xlu0 %175
  %177 = vrot.lane.b32.xlu0 %v165, 64
  %v178 = vpop.permute.xlu0 %177
  %179 = vrot.lane.b32.xlu0 %v166, 64
  %v180 = vpop.permute.xlu0 %179
  %181 = vrot.lane.b32.xlu0 %v167, 64
  %v182 = vpop.permute.xlu0 %181
  %183 = vrot.lane.b32.xlu0 %v168, 64
  %v184 = vpop.permute.xlu0 %183
  %vm185 = vcmask 261120
  %v187 = vsel %vm185, %v81, %v146
  %v189 = vsel %vm185, %v82, %v148
  %v191 = vsel %vm185, %v83, %v150
  %v193 = vsel %vm185, %v84, %v152
  %v195 = vsel %vm185, %v85, %v154
  %v197 = vsel %vm185, %v86, %v156
  %v199 = vsel %vm185, %v87, %v158
  %v201 = vsel %vm185, %v88, %v160
  %vm202 = vcmask 523264
  %v204 = vsel %vm202, %v187, %v170
  %v206 = vsel %vm202, %v189, %v172
  %v208 = vsel %vm202, %v191, %v174
  %v210 = vsel %vm202, %v193, %v176
  %v212 = vsel %vm202, %v195, %v178
  %v214 = vsel %vm202, %v197, %v180
  %v216 = vsel %vm202, %v199, %v182
  %v218 = vsel %vm202, %v201, %v184
  %v227 = vrot.slane %v204, 1
  %v228 = vrot.slane %v204, 2
  %v229 = vrot.slane %v204, 3
  %v230 = vrot.slane %v204, 4
  %v231 = vrot.slane %v204, 5
  %v232 = vrot.slane %v204, 6
  %v233 = vrot.slane %v206, 1
  %v234 = vrot.slane %v206, 2
  %v235 = vrot.slane %v206, 3
  %v236 = vrot.slane %v206, 4
  %v237 = vrot.slane %v206, 5
  %v238 = vrot.slane %v206, 6
  %v239 = vrot.slane %v208, 1
  %v240 = vrot.slane %v208, 2
  %v241 = vrot.slane %v208, 3
  %v242 = vrot.slane %v208, 4
  %v243 = vrot.slane %v208, 5
  %v244 = vrot.slane %v208, 6
  %v245 = vrot.slane %v210, 1
  %v246 = vrot.slane %v210, 2
  %v247 = vrot.slane %v210, 3
  %v248 = vrot.slane %v210, 4
  %v249 = vrot.slane %v210, 5
  %v250 = vrot.slane %v210, 6
  %v251 = vrot.slane %v212, 1
  %v252 = vrot.slane %v212, 2
  %v253 = vrot.slane %v212, 3
  %v254 = vrot.slane %v212, 4
  %v255 = vrot.slane %v212, 5
  %v256 = vrot.slane %v212, 6
  %v257 = vrot.slane %v214, 1
  %v258 = vrot.slane %v214, 2
  %v259 = vrot.slane %v214, 3
  %v260 = vrot.slane %v214, 4
  %v261 = vrot.slane %v214, 5
  %v262 = vrot.slane %v214, 6
  %v263 = vrot.slane %v216, 1
  %v264 = vrot.slane %v216, 2
  %v265 = vrot.slane %v216, 3
  %v266 = vrot.slane %v216, 4
  %v267 = vrot.slane %v216, 5
  %v268 = vrot.slane %v216, 6
  %v269 = vrot.slane %v218, 1
  %v270 = vrot.slane %v218, 2
  %v271 = vrot.slane %v218, 3
  %v272 = vrot.slane %v218, 4
  %v273 = vrot.slane %v218, 5
  %v274 = vrot.slane %v218, 6
  %v275 = vld [vmem:[%s1] sm:$0xf]
  %v276 = vld [vmem:[%s1 + $0x4] sm:$0xf]
  %v277 = vld [vmem:[%s1 + $0x8] sm:$0xf]
  %v278 = vld [vmem:[%s1 + $0xc] sm:$0xf]
  %v279 = vld [vmem:[%s1 + $0x10] sm:$0xf]
  %v280 = vld [vmem:[%s1 + $0x14] sm:$0xf]
  %v281 = vld [vmem:[%s1 + $0x18] sm:$0xf]
  %v282 = vld [vmem:[%s1 + $0x1c] sm:$0xf]
  %v283 = vld [vmem:[%s1 + $0x20] sm:$0xf]
  %v284 = vld [vmem:[%s1 + $0x24] sm:$0xf]
  %v285 = vld [vmem:[%s1 + $0x28] sm:$0xf]
  %v286 = vld [vmem:[%s1 + $0x2c] sm:$0xf]
  %287 = vst [vmem:[#allocation1] ss:$9 sm:$0xff] %v204
  %s289 = scalar_lea.vmem [#allocation1], 1
  %290 = vst [vmem:[%s289] ss:$9 sm:$0xff] %v227
  %s292 = scalar_lea.vmem [#allocation1], 2
  %293 = vst [vmem:[%s292] ss:$9 sm:$0xff] %v228
  %s295 = scalar_lea.vmem [#allocation1], 3
  %296 = vst [vmem:[%s295] ss:$9 sm:$0xff] %v229
  %s298 = scalar_lea.vmem [#allocation1], 4
  %299 = vst [vmem:[%s298] ss:$9 sm:$0xff] %v230
  %s301 = scalar_lea.vmem [#allocation1], 5
  %302 = vst [vmem:[%s301] ss:$9 sm:$0xff] %v231
  %s304 = scalar_lea.vmem [#allocation1], 6
  %305 = vst [vmem:[%s304] ss:$9 sm:$0xff] %v232
  %s306 = scalar_lea.vmem [#allocation1], 7
  %307 = vst [vmem:[%s306] ss:$9 sm:$0xff] %v206
  %v308 = vld [vmem:[#allocation1] sm:$0xff]
  %310 = vst [vmem:[#allocation1] ss:$9 sm:$0xff] %v233
  %312 = vst [vmem:[%s289] ss:$9 sm:$0xff] %v234
  %314 = vst [vmem:[%s292] ss:$9 sm:$0xff] %v235
  %316 = vst [vmem:[%s295] ss:$9 sm:$0xff] %v236
  %318 = vst [vmem:[%s298] ss:$9 sm:$0xff] %v237
  %320 = vst [vmem:[%s301] ss:$9 sm:$0xff] %v238
  %321 = vst [vmem:[%s304] ss:$9 sm:$0xff] %v208
  %323 = vst [vmem:[%s306] ss:$9 sm:$0xff] %v239
  %v324 = vld [vmem:[#allocation1] sm:$0xff]
  %326 = vst [vmem:[#allocation1] ss:$9 sm:$0xff] %v240
  %328 = vst [vmem:[%s289] ss:$9 sm:$0xff] %v241
  %330 = vst [vmem:[%s292] ss:$9 sm:$0xff] %v242
  %332 = vst [vmem:[%s295] ss:$9 sm:$0xff] %v243
  %334 = vst [vmem:[%s298] ss:$9 sm:$0xff] %v244
  %335 = vst [vmem:[%s301] ss:$9 sm:$0xff] %v210
  %337 = vst [vmem:[%s304] ss:$9 sm:$0xff] %v245
  %339 = vst [vmem:[%s306] ss:$9 sm:$0xff] %v246
  %v340 = vld [vmem:[#allocation1] sm:$0xff]
  %342 = vst [vmem:[#allocation1] ss:$9 sm:$0xff] %v247
  %344 = vst [vmem:[%s289] ss:$9 sm:$0xff] %v248
  %346 = vst [vmem:[%s292] ss:$9 sm:$0xff] %v249
  %348 = vst [vmem:[%s295] ss:$9 sm:$0xff] %v250
  %349 = vst [vmem:[%s298] ss:$9 sm:$0xff] %v212
  %351 = vst [vmem:[%s301] ss:$9 sm:$0xff] %v251
  %353 = vst [vmem:[%s304] ss:$9 sm:$0xff] %v252
  %355 = vst [vmem:[%s306] ss:$9 sm:$0xff] %v253
  %v356 = vld [vmem:[#allocation1] sm:$0xff]
  %358 = vst [vmem:[#allocation1] ss:$9 sm:$0xff] %v254
  %360 = vst [vmem:[%s289] ss:$9 sm:$0xff] %v255
  %362 = vst [vmem:[%s292] ss:$9 sm:$0xff] %v256
  %363 = vst [vmem:[%s295] ss:$9 sm:$0xff] %v214
  %365 = vst [vmem:[%s298] ss:$9 sm:$0xff] %v257
  %367 = vst [vmem:[%s301] ss:$9 sm:$0xff] %v258
  %369 = vst [vmem:[%s304] ss:$9 sm:$0xff] %v259
  %371 = vst [vmem:[%s306] ss:$9 sm:$0xff] %v260
  %v372 = vld [vmem:[#allocation1] sm:$0xff]
  %374 = vst [vmem:[#allocation1] ss:$9 sm:$0xff] %v261
  %376 = vst [vmem:[%s289] ss:$9 sm:$0xff] %v262
  %377 = vst [vmem:[%s292] ss:$9 sm:$0xff] %v216
  %379 = vst [vmem:[%s295] ss:$9 sm:$0xff] %v263
  %381 = vst [vmem:[%s298] ss:$9 sm:$0xff] %v264
  %383 = vst [vmem:[%s301] ss:$9 sm:$0xff] %v265
  %385 = vst [vmem:[%s304] ss:$9 sm:$0xff] %v266
  %387 = vst [vmem:[%s306] ss:$9 sm:$0xff] %v267
  %v388 = vld [vmem:[#allocation1] sm:$0xff]
  %390 = vst [vmem:[#allocation1] ss:$9 sm:$0xff] %v268
  %391 = vst [vmem:[%s289] ss:$9 sm:$0xff] %v218
  %393 = vst [vmem:[%s292] ss:$9 sm:$0xff] %v269
  %395 = vst [vmem:[%s295] ss:$9 sm:$0xff] %v270
  %397 = vst [vmem:[%s298] ss:$9 sm:$0xff] %v271
  %399 = vst [vmem:[%s301] ss:$9 sm:$0xff] %v272
  %401 = vst [vmem:[%s304] ss:$9 sm:$0xff] %v273
  %403 = vst [vmem:[%s306] ss:$9 sm:$0xff] %v274
  %v404 = vld [vmem:[#allocation1] sm:$0xff]
  %v417 = vunpack.c.l.b16 %v275
  %v418 = vunpack.c.l.b16 %v276
  %v419 = vunpack.c.l.b16 %v277
  %v420 = vunpack.c.l.b16 %v278
  %v421 = vunpack.c.l.b16 %v279
  %v422 = vunpack.c.l.b16 %v280
  %v423 = vunpack.c.l.b16 %v281
  %v424 = vunpack.c.l.b16 %v282
  %v425 = vunpack.c.l.b16 %v283
  %v426 = vunpack.c.l.b16 %v284
  %v427 = vunpack.c.l.b16 %v285
  %v428 = vunpack.c.l.b16 %v286
  %v429 = vpack.c.b16 %v418, %v417
  %v430 = vpack.c.b16 %v420, %v419
  %v431 = vpack.c.b16 %v422, %v421
  %v432 = vpack.c.b16 %v424, %v423
  %v433 = vpack.c.b16 %v426, %v425
  %v434 = vpack.c.b16 %v428, %v427
  %vm441 = vcmask 785408
  %v442 = vsel %vm441, %v308, 0
  %v444 = vsel %vm441, %v324, 0
  %v446 = vsel %vm441, %v340, 0
  %v448 = vsel %vm441, %v356, 0
  %v450 = vsel %vm441, %v372, 0
  %v452 = vsel %vm441, %v388, 0
  %v454 = vsel %vm441, %v404, 0
  %456 = vmatpush.bf16.msra.mxu0 0
  %457 = vmatpush.bf16.msra.mxu0 0
  %458 = vmatpush.bf16.msra.mxu0 %v434
  %459 = vmatpush.bf16.msra.mxu0 %v433
  %460 = vmatpush.bf16.msra.mxu0 %v432
  %461 = vmatpush.bf16.msra.mxu0 %v431
  %462 = vmatpush.bf16.msra.mxu0 %v430
  %463 = vmatpush.bf16.msra.mxu0 %v429
  %464 = vmatmul.bf16.gmra.mxu0 %v442
  %v465 = vpop.f32.mrf.mxu0
  %v466 = vadd.f32 0.0, %v465
  %v467 = vpop.f32.mrf.mxu0
  %v468 = vadd.f32 0.0, %v467
  %469 = vmatmul.bf16.gmra.mxu0 %v444
  %v470 = vpop.f32.mrf.mxu0
  %v471 = vadd.f32 0.0, %v470
  %v472 = vpop.f32.mrf.mxu0
  %v473 = vadd.f32 0.0, %v472
  %474 = vmatmul.bf16.gmra.mxu0 %v446
  %v475 = vpop.f32.mrf.mxu0
  %v476 = vadd.f32 0.0, %v475
  %v477 = vpop.f32.mrf.mxu0
  %v478 = vadd.f32 0.0, %v477
  %479 = vmatmul.bf16.gmra.mxu0 %v448
  %v480 = vpop.f32.mrf.mxu0
  %v481 = vadd.f32 0.0, %v480
  %v482 = vpop.f32.mrf.mxu0
  %v483 = vadd.f32 0.0, %v482
  %484 = vmatmul.bf16.gmra.mxu0 %v450
  %v485 = vpop.f32.mrf.mxu0
  %v486 = vadd.f32 0.0, %v485
  %v487 = vpop.f32.mrf.mxu0
  %v488 = vadd.f32 0.0, %v487
  %489 = vmatmul.bf16.gmra.mxu0 %v452
  %v490 = vpop.f32.mrf.mxu0
  %v491 = vadd.f32 0.0, %v490
  %v492 = vpop.f32.mrf.mxu0
  %v493 = vadd.f32 0.0, %v492
  %494 = vmatmul.bf16.gmra.mxu0 %v454
  %v495 = vpop.f32.mrf.mxu0
  %v496 = vadd.f32 0.0, %v495
  %v497 = vpop.f32.mrf.mxu0
  %v498 = vadd.f32 0.0, %v497
  %499 = vdwg.mxu0
  %v514 = vrot.slane %v466, 2
  %v515 = vrot.slane %v466, 4
  %v516 = vrot.slane %v466, 6
  %v517 = vrot.slane %v468, 2
  %v518 = vrot.slane %v468, 4
  %v519 = vrot.slane %v468, 6
  %v520 = vrot.slane %v471, 2
  %v521 = vrot.slane %v471, 4
  %v522 = vrot.slane %v471, 6
  %v523 = vrot.slane %v473, 2
  %v524 = vrot.slane %v473, 4
  %v525 = vrot.slane %v473, 6
  %v526 = vrot.slane %v476, 2
  %v527 = vrot.slane %v476, 4
  %v528 = vrot.slane %v476, 6
  %v529 = vrot.slane %v478, 2
  %v530 = vrot.slane %v478, 4
  %v531 = vrot.slane %v478, 6
  %v532 = vrot.slane %v481, 2
  %v533 = vrot.slane %v481, 4
  %v534 = vrot.slane %v481, 6
  %v535 = vrot.slane %v483, 2
  %v536 = vrot.slane %v483, 4
  %v537 = vrot.slane %v483, 6
  %v538 = vrot.slane %v486, 2
  %v539 = vrot.slane %v486, 4
  %v540 = vrot.slane %v486, 6
  %v541 = vrot.slane %v488, 2
  %v542 = vrot.slane %v488, 4
  %v543 = vrot.slane %v488, 6
  %v544 = vrot.slane %v491, 2
  %v545 = vrot.slane %v491, 4
  %v546 = vrot.slane %v491, 6
  %v547 = vrot.slane %v493, 2
  %v548 = vrot.slane %v493, 4
  %v549 = vrot.slane %v493, 6
  %v550 = vrot.slane %v496, 2
  %v551 = vrot.slane %v496, 4
  %v552 = vrot.slane %v496, 6
  %v553 = vrot.slane %v498, 2
  %v554 = vrot.slane %v498, 4
  %v555 = vrot.slane %v498, 6
  %556 = vst [vmem:[#allocation1] ss:$4 sm:$0xff] %v466
  %s557 = scalar_lea.vmem [#allocation1], 1
  %558 = vst [vmem:[%s557] ss:$4 sm:$0xff] %v514
  %s559 = scalar_lea.vmem [#allocation1], 2
  %560 = vst [vmem:[%s559] ss:$4 sm:$0xff] %v515
  %s561 = scalar_lea.vmem [#allocation1], 3
  %562 = vst [vmem:[%s561] ss:$4 sm:$0xff] %v516
  %s563 = scalar_lea.vmem [#allocation1], 32
  %564 = vst [vmem:[%s563] ss:$4 sm:$0xff] %v468
  %s565 = scalar_lea.vmem [#allocation1], 33
  %566 = vst [vmem:[%s565] ss:$4 sm:$0xff] %v517
  %s567 = scalar_lea.vmem [#allocation1], 34
  %568 = vst [vmem:[%s567] ss:$4 sm:$0xff] %v518
  %v569 = vld.sshfl [vmem:[#allocation1] sm:$0xff pattern:$0x73625140]
  %v570 = vld.sshfl [vmem:[#allocation1 + $0x20] sm:$0xff pattern:$0x73625140]
  %571 = vst [vmem:[#allocation1] ss:$4 sm:$0xff] %v519
  %572 = vst [vmem:[%s557] ss:$4 sm:$0xff] %v471
  %573 = vst [vmem:[%s559] ss:$4 sm:$0xff] %v520
  %574 = vst [vmem:[%s561] ss:$4 sm:$0xff] %v521
  %575 = vst [vmem:[%s563] ss:$4 sm:$0xff] %v522
  %576 = vst [vmem:[%s565] ss:$4 sm:$0xff] %v473
  %577 = vst [vmem:[%s567] ss:$4 sm:$0xff] %v523
  %v578 = vld.sshfl [vmem:[#allocation1] sm:$0xff pattern:$0x73625140]
  %v579 = vld.sshfl [vmem:[#allocation1 + $0x20] sm:$0xff pattern:$0x73625140]
  %580 = vst [vmem:[#allocation1] ss:$4 sm:$0xff] %v524
  %581 = vst [vmem:[%s557] ss:$4 sm:$0xff] %v525
  %582 = vst [vmem:[%s559] ss:$4 sm:$0xff] %v476
  %583 = vst [vmem:[%s561] ss:$4 sm:$0xff] %v526
  %584 = vst [vmem:[%s563] ss:$4 sm:$0xff] %v527
  %585 = vst [vmem:[%s565] ss:$4 sm:$0xff] %v528
  %586 = vst [vmem:[%s567] ss:$4 sm:$0xff] %v478
  %v587 = vld.sshfl [vmem:[#allocation1] sm:$0xff pattern:$0x73625140]
  %v588 = vld.sshfl [vmem:[#allocation1 + $0x20] sm:$0xff pattern:$0x73625140]
  %589 = vst [vmem:[#allocation1] ss:$4 sm:$0xff] %v529
  %590 = vst [vmem:[%s557] ss:$4 sm:$0xff] %v530
  %591 = vst [vmem:[%s559] ss:$4 sm:$0xff] %v531
  %592 = vst [vmem:[%s561] ss:$4 sm:$0xff] %v481
  %593 = vst [vmem:[%s563] ss:$4 sm:$0xff] %v532
  %594 = vst [vmem:[%s565] ss:$4 sm:$0xff] %v533
  %595 = vst [vmem:[%s567] ss:$4 sm:$0xff] %v534
  %v596 = vld.sshfl [vmem:[#allocation1] sm:$0xff pattern:$0x73625140]
  %v597 = vld.sshfl [vmem:[#allocation1 + $0x20] sm:$0xff pattern:$0x73625140]
  %598 = vst [vmem:[#allocation1] ss:$4 sm:$0xff] %v483
  %599 = vst [vmem:[%s557] ss:$4 sm:$0xff] %v535
  %600 = vst [vmem:[%s559] ss:$4 sm:$0xff] %v536
  %601 = vst [vmem:[%s561] ss:$4 sm:$0xff] %v537
  %602 = vst [vmem:[%s563] ss:$4 sm:$0xff] %v486
  %603 = vst [vmem:[%s565] ss:$4 sm:$0xff] %v538
  %604 = vst [vmem:[%s567] ss:$4 sm:$0xff] %v539
  %v605 = vld.sshfl [vmem:[#allocation1] sm:$0xff pattern:$0x73625140]
  %v606 = vld.sshfl [vmem:[#allocation1 + $0x20] sm:$0xff pattern:$0x73625140]
  %607 = vst [vmem:[#allocation1] ss:$4 sm:$0xff] %v540
  %608 = vst [vmem:[%s557] ss:$4 sm:$0xff] %v488
  %609 = vst [vmem:[%s559] ss:$4 sm:$0xff] %v541
  %610 = vst [vmem:[%s561] ss:$4 sm:$0xff] %v542
  %611 = vst [vmem:[%s563] ss:$4 sm:$0xff] %v543
  %612 = vst [vmem:[%s565] ss:$4 sm:$0xff] %v491
  %613 = vst [vmem:[%s567] ss:$4 sm:$0xff] %v544
  %v614 = vld.sshfl [vmem:[#allocation1] sm:$0xff pattern:$0x73625140]
  %v615 = vld.sshfl [vmem:[#allocation1 + $0x20] sm:$0xff pattern:$0x73625140]
  %616 = vst [vmem:[#allocation1] ss:$4 sm:$0xff] %v545
  %617 = vst [vmem:[%s557] ss:$4 sm:$0xff] %v546
  %618 = vst [vmem:[%s559] ss:$4 sm:$0xff] %v493
  %619 = vst [vmem:[%s561] ss:$4 sm:$0xff] %v547
  %620 = vst [vmem:[%s563] ss:$4 sm:$0xff] %v548
  %621 = vst [vmem:[%s565] ss:$4 sm:$0xff] %v549
  %622 = vst [vmem:[%s567] ss:$4 sm:$0xff] %v496
  %v623 = vld.sshfl [vmem:[#allocation1] sm:$0xff pattern:$0x73625140]
  %v624 = vld.sshfl [vmem:[#allocation1 + $0x20] sm:$0xff pattern:$0x73625140]
  %625 = vst [vmem:[#allocation1] ss:$4 sm:$0xff] %v550
  %626 = vst [vmem:[%s557] ss:$4 sm:$0xff] %v551
  %627 = vst [vmem:[%s559] ss:$4 sm:$0xff] %v552
  %628 = vst [vmem:[%s561] ss:$4 sm:$0xff] %v498
  %629 = vst [vmem:[%s563] ss:$4 sm:$0xff] %v553
  %630 = vst [vmem:[%s565] ss:$4 sm:$0xff] %v554
  %631 = vst [vmem:[%s567] ss:$4 sm:$0xff] %v555
  %v632 = vld.sshfl [vmem:[#allocation1] sm:$0xff pattern:$0x73625140]
  %v633 = vld.sshfl [vmem:[#allocation1 + $0x20] sm:$0xff pattern:$0x73625140]
  %vm650 = vcmask 1045504
  %v651 = vsel %vm650, %v570, -inf
  %v652 = vmax.f32 %v569, %v651
  %v653 = vrot.slane %v652, 4
  %v654 = vmax.f32 %v652, %v653
  %v655 = vrot.slane %v654, 2
  %v656 = vmax.f32 %v654, %v655
  %v657 = vrot.slane %v656, 1
  %v658 = vmax.f32 %v656, %v657
  %v659 = vsel %vm650, %v579, -inf
  %v660 = vmax.f32 %v578, %v659
  %v661 = vrot.slane %v660, 4
  %v662 = vmax.f32 %v660, %v661
  %v663 = vrot.slane %v662, 2
  %v664 = vmax.f32 %v662, %v663
  %v665 = vrot.slane %v664, 1
  %v666 = vmax.f32 %v664, %v665
  %v667 = vsel %vm650, %v588, -inf
  %v668 = vmax.f32 %v587, %v667
  %v669 = vrot.slane %v668, 4
  %v670 = vmax.f32 %v668, %v669
  %v671 = vrot.slane %v670, 2
  %v672 = vmax.f32 %v670, %v671
  %v673 = vrot.slane %v672, 1
  %v674 = vmax.f32 %v672, %v673
  %v675 = vsel %vm650, %v597, -inf
  %v676 = vmax.f32 %v596, %v675
  %v677 = vrot.slane %v676, 4
  %v678 = vmax.f32 %v676, %v677
  %v679 = vrot.slane %v678, 2
  %v680 = vmax.f32 %v678, %v679
  %v681 = vrot.slane %v680, 1
  %v682 = vmax.f32 %v680, %v681
  %v683 = vsel %vm650, %v606, -inf
  %v684 = vmax.f32 %v605, %v683
  %v685 = vrot.slane %v684, 4
  %v686 = vmax.f32 %v684, %v685
  %v687 = vrot.slane %v686, 2
  %v688 = vmax.f32 %v686, %v687
  %v689 = vrot.slane %v688, 1
  %v690 = vmax.f32 %v688, %v689
  %v691 = vsel %vm650, %v615, -inf
  %v692 = vmax.f32 %v614, %v691
  %v693 = vrot.slane %v692, 4
  %v694 = vmax.f32 %v692, %v693
  %v695 = vrot.slane %v694, 2
  %v696 = vmax.f32 %v694, %v695
  %v697 = vrot.slane %v696, 1
  %v698 = vmax.f32 %v696, %v697
  %v699 = vsel %vm650, %v624, -inf
  %v700 = vmax.f32 %v623, %v699
  %v701 = vrot.slane %v700, 4
  %v702 = vmax.f32 %v700, %v701
  %v703 = vrot.slane %v702, 2
  %v704 = vmax.f32 %v702, %v703
  %v705 = vrot.slane %v704, 1
  %v706 = vmax.f32 %v704, %v705
  %v707 = vsel %vm650, %v633, -inf
  %v708 = vmax.f32 %v632, %v707
  %v709 = vrot.slane %v708, 4
  %v710 = vmax.f32 %v708, %v709
  %v711 = vrot.slane %v710, 2
  %v712 = vmax.f32 %v710, %v711
  %v713 = vrot.slane %v712, 1
  %v714 = vmax.f32 %v712, %v713
  %v715 = vld [vmem:[%s2] sm:$0x1]
  %v717 = vperm.slane %v715, 0
  %v719 = vadd.f32 %v658, %v717
  %v720 = vadd.f32 %v666, %v717
  %v721 = vadd.f32 %v674, %v717
  %v722 = vadd.f32 %v682, %v717
  %v723 = vadd.f32 %v690, %v717
  %v724 = vadd.f32 %v698, %v717
  %v725 = vadd.f32 %v706, %v717
  %v726 = vadd.f32 %v714, %v717
  %v727 = vmax.f32 %v719, 0.0
  %v728 = vmax.f32 %v720, 0.0
  %v729 = vmax.f32 %v721, 0.0
  %v730 = vmax.f32 %v722, 0.0
  %v731 = vmax.f32 %v723, 0.0
  %v732 = vmax.f32 %v724, 0.0
  %v733 = vmax.f32 %v725, 0.0
  %v734 = vmax.f32 %v726, 0.0
  %v735 = vrot.slane %v90, 1
  %v736 = vrot.slane %v92, 2
  %v737 = vor.u32 %v735, %v736
  %v738 = vrot.slane %v97, 1
  %v739 = vrot.slane %v99, 2
  %v740 = vor.u32 %v738, %v739
  %v741 = vrot.slane %v104, 1
  %v742 = vrot.slane %v106, 2
  %v743 = vor.u32 %v741, %v742
  %v744 = vrot.slane %v111, 1
  %v745 = vrot.slane %v113, 2
  %v746 = vor.u32 %v744, %v745
  %v747 = vrot.slane %v118, 1
  %v748 = vrot.slane %v120, 2
  %v749 = vor.u32 %v747, %v748
  %v750 = vrot.slane %v125, 1
  %v751 = vrot.slane %v127, 2
  %v752 = vor.u32 %v750, %v751
  %v753 = vrot.slane %v132, 1
  %v754 = vrot.slane %v134, 2
  %v755 = vor.u32 %v753, %v754
  %v756 = vrot.slane %v139, 1
  %v757 = vrot.slane %v141, 2
  %v758 = vor.u32 %v756, %v757
  %759 = vrot.lane.b32.xlu0 %v737, 96
  %v760 = vpop.permute.xlu0 %759
  %761 = vrot.lane.b32.xlu0 %v740, 96
  %v762 = vpop.permute.xlu0 %761
  %763 = vrot.lane.b32.xlu0 %v743, 96
  %v764 = vpop.permute.xlu0 %763
  %765 = vrot.lane.b32.xlu0 %v746, 96
  %v766 = vpop.permute.xlu0 %765
  %767 = vrot.lane.b32.xlu0 %v749, 96
  %v768 = vpop.permute.xlu0 %767
  %769 = vrot.lane.b32.xlu0 %v752, 96
  %v770 = vpop.permute.xlu0 %769
  %771 = vrot.lane.b32.xlu0 %v755, 96
  %v772 = vpop.permute.xlu0 %771
  %773 = vrot.lane.b32.xlu0 %v758, 96
  %v774 = vpop.permute.xlu0 %773
  %v776 = vsel %vm441, %v204, %v760
  %v778 = vsel %vm441, %v206, %v762
  %v780 = vsel %vm441, %v208, %v764
  %v782 = vsel %vm441, %v210, %v766
  %v784 = vsel %vm441, %v212, %v768
  %v786 = vsel %vm441, %v214, %v770
  %v788 = vsel %vm441, %v216, %v772
  %v790 = vsel %vm441, %v218, %v774
  %v799 = vrot.slane %v776, 1
  %v800 = vrot.slane %v776, 2
  %v801 = vrot.slane %v776, 3
  %v802 = vrot.slane %v776, 4
  %v803 = vrot.slane %v776, 5
  %v804 = vrot.slane %v776, 6
  %v805 = vrot.slane %v778, 1
  %v806 = vrot.slane %v778, 2
  %v807 = vrot.slane %v778, 3
  %v808 = vrot.slane %v778, 4
  %v809 = vrot.slane %v778, 5
  %v810 = vrot.slane %v778, 6
  %v811 = vrot.slane %v780, 1
  %v812 = vrot.slane %v780, 2
  %v813 = vrot.slane %v780, 3
  %v814 = vrot.slane %v780, 4
  %v815 = vrot.slane %v780, 5
  %v816 = vrot.slane %v780, 6
  %v817 = vrot.slane %v782, 1
  %v818 = vrot.slane %v782, 2
  %v819 = vrot.slane %v782, 3
  %v820 = vrot.slane %v782, 4
  %v821 = vrot.slane %v782, 5
  %v822 = vrot.slane %v782, 6
  %v823 = vrot.slane %v784, 1
  %v824 = vrot.slane %v784, 2
  %v825 = vrot.slane %v784, 3
  %v826 = vrot.slane %v784, 4
  %v827 = vrot.slane %v784, 5
  %v828 = vrot.slane %v784, 6
  %v829 = vrot.slane %v786, 1
  %v830 = vrot.slane %v786, 2
  %v831 = vrot.slane %v786, 3
  %v832 = vrot.slane %v786, 4
  %v833 = vrot.slane %v786, 5
  %v834 = vrot.slane %v786, 6
  %v835 = vrot.slane %v788, 1
  %v836 = vrot.slane %v788, 2
  %v837 = vrot.slane %v788, 3
  %v838 = vrot.slane %v788, 4
  %v839 = vrot.slane %v788, 5
  %v840 = vrot.slane %v788, 6
  %v841 = vrot.slane %v790, 1
  %v842 = vrot.slane %v790, 2
  %v843 = vrot.slane %v790, 3
  %v844 = vrot.slane %v790, 4
  %v845 = vrot.slane %v790, 5
  %v846 = vrot.slane %v790, 6
  %v847 = vunpack.i.l.s16 %v776
  %v848 = vunpack.i.h.s16 %v776
  %v849 = vunpack.i.l.s16 %v799
  %v850 = vunpack.i.h.s16 %v799
  %v851 = vunpack.i.l.s16 %v800
  %v852 = vunpack.i.h.s16 %v800
  %v853 = vunpack.i.l.s16 %v801
  %v854 = vunpack.i.h.s16 %v801
  %v855 = vunpack.i.l.s16 %v802
  %v856 = vunpack.i.h.s16 %v802
  %v857 = vunpack.i.l.s16 %v803
  %v858 = vunpack.i.h.s16 %v803
  %v859 = vunpack.i.l.s16 %v804
  %v860 = vunpack.i.l.s16 %v778
  %v861 = vunpack.i.h.s16 %v778
  %v862 = vunpack.i.l.s16 %v805
  %v863 = vunpack.i.h.s16 %v805
  %v864 = vunpack.i.l.s16 %v806
  %v865 = vunpack.i.h.s16 %v806
  %v866 = vunpack.i.l.s16 %v807
  %v867 = vunpack.i.h.s16 %v807
  %v868 = vunpack.i.l.s16 %v808
  %v869 = vunpack.i.h.s16 %v808
  %v870 = vunpack.i.l.s16 %v809
  %v871 = vunpack.i.h.s16 %v809
  %v872 = vunpack.i.l.s16 %v810
  %v873 = vunpack.i.l.s16 %v780
  %v874 = vunpack.i.h.s16 %v780
  %v875 = vunpack.i.l.s16 %v811
  %v876 = vunpack.i.h.s16 %v811
  %v877 = vunpack.i.l.s16 %v812
  %v878 = vunpack.i.h.s16 %v812
  %v879 = vunpack.i.l.s16 %v813
  %v880 = vunpack.i.h.s16 %v813
  %v881 = vunpack.i.l.s16 %v814
  %v882 = vunpack.i.h.s16 %v814
  %v883 = vunpack.i.l.s16 %v815
  %v884 = vunpack.i.h.s16 %v815
  %v885 = vunpack.i.l.s16 %v816
  %v886 = vunpack.i.l.s16 %v782
  %v887 = vunpack.i.h.s16 %v782
  %v888 = vunpack.i.l.s16 %v817
  %v889 = vunpack.i.h.s16 %v817
  %v890 = vunpack.i.l.s16 %v818
  %v891 = vunpack.i.h.s16 %v818
  %v892 = vunpack.i.l.s16 %v819
  %v893 = vunpack.i.h.s16 %v819
  %v894 = vunpack.i.l.s16 %v820
  %v895 = vunpack.i.h.s16 %v820
  %v896 = vunpack.i.l.s16 %v821
  %v897 = vunpack.i.h.s16 %v821
  %v898 = vunpack.i.l.s16 %v822
  %v899 = vunpack.i.l.s16 %v784
  %v900 = vunpack.i.h.s16 %v784
  %v901 = vunpack.i.l.s16 %v823
  %v902 = vunpack.i.h.s16 %v823
  %v903 = vunpack.i.l.s16 %v824
  %v904 = vunpack.i.h.s16 %v824
  %v905 = vunpack.i.l.s16 %v825
  %v906 = vunpack.i.h.s16 %v825
  %v907 = vunpack.i.l.s16 %v826
  %v908 = vunpack.i.h.s16 %v826
  %v909 = vunpack.i.l.s16 %v827
  %v910 = vunpack.i.h.s16 %v827
  %v911 = vunpack.i.l.s16 %v828
  %v912 = vunpack.i.l.s16 %v786
  %v913 = vunpack.i.h.s16 %v786
  %v914 = vunpack.i.l.s16 %v829
  %v915 = vunpack.i.h.s16 %v829
  %v916 = vunpack.i.l.s16 %v830
  %v917 = vunpack.i.h.s16 %v830
  %v918 = vunpack.i.l.s16 %v831
  %v919 = vunpack.i.h.s16 %v831
  %v920 = vunpack.i.l.s16 %v832
  %v921 = vunpack.i.h.s16 %v832
  %v922 = vunpack.i.l.s16 %v833
  %v923 = vunpack.i.h.s16 %v833
  %v924 = vunpack.i.l.s16 %v834
  %v925 = vunpack.i.l.s16 %v788
  %v926 = vunpack.i.h.s16 %v788
  %v927 = vunpack.i.l.s16 %v835
  %v928 = vunpack.i.h.s16 %v835
  %v929 = vunpack.i.l.s16 %v836
  %v930 = vunpack.i.h.s16 %v836
  %v931 = vunpack.i.l.s16 %v837
  %v932 = vunpack.i.h.s16 %v837
  %v933 = vunpack.i.l.s16 %v838
  %v934 = vunpack.i.h.s16 %v838
  %v935 = vunpack.i.l.s16 %v839
  %v936 = vunpack.i.h.s16 %v839
  %v937 = vunpack.i.l.s16 %v840
  %v938 = vunpack.i.l.s16 %v790
  %v939 = vunpack.i.h.s16 %v790
  %v940 = vunpack.i.l.s16 %v841
  %v941 = vunpack.i.h.s16 %v841
  %v942 = vunpack.i.l.s16 %v842
  %v943 = vunpack.i.h.s16 %v842
  %v944 = vunpack.i.l.s16 %v843
  %v945 = vunpack.i.h.s16 %v843
  %v946 = vunpack.i.l.s16 %v844
  %v947 = vunpack.i.h.s16 %v844
  %v948 = vunpack.i.l.s16 %v845
  %v949 = vunpack.i.h.s16 %v845
  %v950 = vunpack.i.l.s16 %v846
  %v951 = vld [vmem:[%s3] sm:$0xf]
  %v952 = vld [vmem:[%s3 + $0x4] sm:$0xf]
  %v953 = vld [vmem:[%s3 + $0x8] sm:$0xf]
  %v954 = vld [vmem:[%s3 + $0xc] sm:$0xf]
  %v955 = vld [vmem:[%s3 + $0x10] sm:$0xf]
  %v956 = vld [vmem:[%s3 + $0x14] sm:$0xf]
  %v957 = vld [vmem:[%s3 + $0x18] sm:$0xf]
  %v958 = vld [vmem:[%s3 + $0x1c] sm:$0xf]
  %v959 = vld [vmem:[%s3 + $0x20] sm:$0xf]
  %v960 = vld [vmem:[%s3 + $0x24] sm:$0xf]
  %v961 = vld [vmem:[%s3 + $0x28] sm:$0xf]
  %v962 = vld [vmem:[%s3 + $0x2c] sm:$0xf]
  %v963 = vld [vmem:[%s3 + $0x30] sm:$0xf]
  %v964 = vld [vmem:[%s3 + $0x34] sm:$0xf]
  %v965 = vld [vmem:[%s3 + $0x38] sm:$0xf]
  %v966 = vld [vmem:[%s3 + $0x3c] sm:$0xf]
  %v967 = vpack.i.b16 %v848, %v847
  %v968 = vpack.i.b16 %v850, %v849
  %v969 = vpack.i.b16 %v852, %v851
  %v970 = vpack.i.b16 %v854, %v853
  %v971 = vpack.i.b16 %v856, %v855
  %v972 = vpack.i.b16 %v858, %v857
  %v973 = vpack.i.b16 %v860, %v859
  %v974 = vpack.i.b16 %v862, %v861
  %v975 = vpack.i.b16 %v864, %v863
  %v976 = vpack.i.b16 %v866, %v865
  %v977 = vpack.i.b16 %v868, %v867
  %v978 = vpack.i.b16 %v870, %v869
  %v979 = vpack.i.b16 %v872, %v871
  %v980 = vpack.i.b16 %v874, %v873
  %v981 = vpack.i.b16 %v876, %v875
  %v982 = vpack.i.b16 %v878, %v877
  %v983 = vpack.i.b16 %v880, %v879
  %v984 = vpack.i.b16 %v882, %v881
  %v985 = vpack.i.b16 %v884, %v883
  %v986 = vpack.i.b16 %v886, %v885
  %v987 = vpack.i.b16 %v888, %v887
  %v988 = vpack.i.b16 %v890, %v889
  %v989 = vpack.i.b16 %v892, %v891
  %v990 = vpack.i.b16 %v894, %v893
  %v991 = vpack.i.b16 %v896, %v895
  %v992 = vpack.i.b16 %v898, %v897
  %v993 = vpack.i.b16 %v900, %v899
  %v994 = vpack.i.b16 %v902, %v901
  %v995 = vpack.i.b16 %v904, %v903
  %v996 = vpack.i.b16 %v906, %v905
  %v997 = vpack.i.b16 %v908, %v907
  %v998 = vpack.i.b16 %v910, %v909
  %v999 = vpack.i.b16 %v912, %v911
  %v1000 = vpack.i.b16 %v914, %v913
  %v1001 = vpack.i.b16 %v916, %v915
  %v1002 = vpack.i.b16 %v918, %v917
  %v1003 = vpack.i.b16 %v920, %v919
  %v1004 = vpack.i.b16 %v922, %v921
  %v1005 = vpack.i.b16 %v924, %v923
  %v1006 = vpack.i.b16 %v926, %v925
  %v1007 = vpack.i.b16 %v928, %v927
  %v1008 = vpack.i.b16 %v930, %v929
  %v1009 = vpack.i.b16 %v932, %v931
  %v1010 = vpack.i.b16 %v934, %v933
  %v1011 = vpack.i.b16 %v936, %v935
  %v1012 = vpack.i.b16 %v938, %v937
  %v1013 = vpack.i.b16 %v940, %v939
  %v1014 = vpack.i.b16 %v942, %v941
  %v1015 = vpack.i.b16 %v944, %v943
  %v1016 = vpack.i.b16 %v946, %v945
  %v1017 = vpack.i.b16 %v948, %v947
  %v1018 = vpack.i.b16 %v950, %v949
  %1020 = vst [vmem:[#allocation1] ss:$9 sm:$0xff] %v967
  %s1022 = scalar_lea.vmem [#allocation1], 1
  %1023 = vst [vmem:[%s1022] ss:$9 sm:$0xff] %v968
  %s1025 = scalar_lea.vmem [#allocation1], 2
  %1026 = vst [vmem:[%s1025] ss:$9 sm:$0xff] %v969
  %s1028 = scalar_lea.vmem [#allocation1], 3
  %1029 = vst [vmem:[%s1028] ss:$9 sm:$0xff] %v970
  %s1031 = scalar_lea.vmem [#allocation1], 4
  %1032 = vst [vmem:[%s1031] ss:$9 sm:$0xff] %v971
  %s1034 = scalar_lea.vmem [#allocation1], 5
  %1035 = vst [vmem:[%s1034] ss:$9 sm:$0xff] %v972
  %s1037 = scalar_lea.vmem [#allocation1], 6
  %1038 = vst [vmem:[%s1037] ss:$9 sm:$0xff] %v973
  %s1040 = scalar_lea.vmem [#allocation1], 7
  %1041 = vst [vmem:[%s1040] ss:$9 sm:$0xff] %v974
  %v1042 = vld [vmem:[#allocation1] sm:$0xff]
  %1044 = vst [vmem:[#allocation1] ss:$9 sm:$0xff] %v975
  %1046 = vst [vmem:[%s1022] ss:$9 sm:$0xff] %v976
  %1048 = vst [vmem:[%s1025] ss:$9 sm:$0xff] %v977
  %1050 = vst [vmem:[%s1028] ss:$9 sm:$0xff] %v978
  %1052 = vst [vmem:[%s1031] ss:$9 sm:$0xff] %v979
  %1054 = vst [vmem:[%s1034] ss:$9 sm:$0xff] %v980
  %1056 = vst [vmem:[%s1037] ss:$9 sm:$0xff] %v981
  %1058 = vst [vmem:[%s1040] ss:$9 sm:$0xff] %v982
  %v1059 = vld [vmem:[#allocation1] sm:$0xff]
  %1061 = vst [vmem:[#allocation1] ss:$9 sm:$0xff] %v983
  %1063 = vst [vmem:[%s1022] ss:$9 sm:$0xff] %v984
  %1065 = vst [vmem:[%s1025] ss:$9 sm:$0xff] %v985
  %1067 = vst [vmem:[%s1028] ss:$9 sm:$0xff] %v986
  %1069 = vst [vmem:[%s1031] ss:$9 sm:$0xff] %v987
  %1071 = vst [vmem:[%s1034] ss:$9 sm:$0xff] %v988
  %1073 = vst [vmem:[%s1037] ss:$9 sm:$0xff] %v989
  %1075 = vst [vmem:[%s1040] ss:$9 sm:$0xff] %v990
  %v1076 = vld [vmem:[#allocation1] sm:$0xff]
  %1078 = vst [vmem:[#allocation1] ss:$9 sm:$0xff] %v991
  %1080 = vst [vmem:[%s1022] ss:$9 sm:$0xff] %v992
  %1082 = vst [vmem:[%s1025] ss:$9 sm:$0xff] %v993
  %1084 = vst [vmem:[%s1028] ss:$9 sm:$0xff] %v994
  %1086 = vst [vmem:[%s1031] ss:$9 sm:$0xff] %v995
  %1088 = vst [vmem:[%s1034] ss:$9 sm:$0xff] %v996
  %1090 = vst [vmem:[%s1037] ss:$9 sm:$0xff] %v997
  %1092 = vst [vmem:[%s1040] ss:$9 sm:$0xff] %v998
  %v1093 = vld [vmem:[#allocation1] sm:$0xff]
  %1095 = vst [vmem:[#allocation1] ss:$9 sm:$0xff] %v999
  %1097 = vst [vmem:[%s1022] ss:$9 sm:$0xff] %v1000
  %1099 = vst [vmem:[%s1025] ss:$9 sm:$0xff] %v1001
  %1101 = vst [vmem:[%s1028] ss:$9 sm:$0xff] %v1002
  %1103 = vst [vmem:[%s1031] ss:$9 sm:$0xff] %v1003
  %1105 = vst [vmem:[%s1034] ss:$9 sm:$0xff] %v1004
  %1107 = vst [vmem:[%s1037] ss:$9 sm:$0xff] %v1005
  %1109 = vst [vmem:[%s1040] ss:$9 sm:$0xff] %v1006
  %v1110 = vld [vmem:[#allocation1] sm:$0xff]
  %1112 = vst [vmem:[#allocation1] ss:$9 sm:$0xff] %v1007
  %1114 = vst [vmem:[%s1022] ss:$9 sm:$0xff] %v1008
  %1116 = vst [vmem:[%s1025] ss:$9 sm:$0xff] %v1009
  %1118 = vst [vmem:[%s1028] ss:$9 sm:$0xff] %v1010
  %1120 = vst [vmem:[%s1031] ss:$9 sm:$0xff] %v1011
  %1122 = vst [vmem:[%s1034] ss:$9 sm:$0xff] %v1012
  %1124 = vst [vmem:[%s1037] ss:$9 sm:$0xff] %v1013
  %1126 = vst [vmem:[%s1040] ss:$9 sm:$0xff] %v1014
  %v1127 = vld [vmem:[#allocation1] sm:$0xff]
  %1129 = vst [vmem:[#allocation1] ss:$9 sm:$0xff] %v1015
  %1131 = vst [vmem:[%s1022] ss:$9 sm:$0xff] %v1016
  %1133 = vst [vmem:[%s1025] ss:$9 sm:$0xff] %v1017
  %1135 = vst [vmem:[%s1028] ss:$9 sm:$0xff] %v1018
  %v1136 = vld [vmem:[#allocation1] sm:$0xff]
  %v1160 = vunpack.c.l.b16 %v951
  %v1161 = vunpack.c.l.b16 %v952
  %v1162 = vunpack.c.l.b16 %v953
  %v1163 = vunpack.c.l.b16 %v954
  %v1164 = vunpack.c.l.b16 %v955
  %v1165 = vunpack.c.l.b16 %v956
  %v1166 = vunpack.c.l.b16 %v957
  %v1167 = vunpack.c.l.b16 %v958
  %v1168 = vunpack.c.l.b16 %v959
  %v1169 = vunpack.c.l.b16 %v960
  %v1170 = vunpack.c.l.b16 %v961
  %v1171 = vunpack.c.l.b16 %v962
  %v1172 = vunpack.c.l.b16 %v963
  %v1173 = vunpack.c.l.b16 %v964
  %v1174 = vunpack.c.l.b16 %v965
  %v1175 = vunpack.c.l.b16 %v966
  %v1176 = vpack.c.b16 %v1161, %v1160
  %v1177 = vpack.c.b16 %v1163, %v1162
  %v1178 = vpack.c.b16 %v1165, %v1164
  %v1179 = vpack.c.b16 %v1167, %v1166
  %v1180 = vpack.c.b16 %v1169, %v1168
  %v1181 = vpack.c.b16 %v1171, %v1170
  %v1182 = vpack.c.b16 %v1173, %v1172
  %v1183 = vpack.c.b16 %v1175, %v1174
  %1192 = vmatpush.bf16.msra.mxu0 %v1183
  %1193 = vmatpush.bf16.msra.mxu0 %v1182
  %1194 = vmatpush.bf16.msra.mxu0 %v1181
  %1195 = vmatpush.bf16.msra.mxu0 %v1180
  %1196 = vmatpush.bf16.msra.mxu0 %v1179
  %1197 = vmatpush.bf16.msra.mxu0 %v1178
  %1198 = vmatpush.bf16.msra.mxu0 %v1177
  %1199 = vmatpush.bf16.msra.mxu0 %v1176
  %1200 = vmatmul.bf16.gmra.mxu0 %v1042
  %v1201 = vpop.f32.mrf.mxu0
  %v1202 = vadd.f32 0.0, %v1201
  %v1203 = vpop.f32.mrf.mxu0
  %v1204 = vadd.f32 0.0, %v1203
  %1205 = vmatmul.bf16.gmra.mxu0 %v1059
  %v1206 = vpop.f32.mrf.mxu0
  %v1207 = vadd.f32 0.0, %v1206
  %v1208 = vpop.f32.mrf.mxu0
  %v1209 = vadd.f32 0.0, %v1208
  %1210 = vmatmul.bf16.gmra.mxu0 %v1076
  %v1211 = vpop.f32.mrf.mxu0
  %v1212 = vadd.f32 0.0, %v1211
  %v1213 = vpop.f32.mrf.mxu0
  %v1214 = vadd.f32 0.0, %v1213
  %1215 = vmatmul.bf16.gmra.mxu0 %v1093
  %v1216 = vpop.f32.mrf.mxu0
  %v1217 = vadd.f32 0.0, %v1216
  %v1218 = vpop.f32.mrf.mxu0
  %v1219 = vadd.f32 0.0, %v1218
  %1220 = vmatmul.bf16.gmra.mxu0 %v1110
  %v1221 = vpop.f32.mrf.mxu0
  %v1222 = vadd.f32 0.0, %v1221
  %v1223 = vpop.f32.mrf.mxu0
  %v1224 = vadd.f32 0.0, %v1223
  %1225 = vmatmul.bf16.gmra.mxu0 %v1127
  %v1226 = vpop.f32.mrf.mxu0
  %v1227 = vadd.f32 0.0, %v1226
  %v1228 = vpop.f32.mrf.mxu0
  %v1229 = vadd.f32 0.0, %v1228
  %1230 = vmatmul.bf16.gmra.mxu0 %v1136
  %v1231 = vpop.f32.mrf.mxu0
  %v1232 = vadd.f32 0.0, %v1231
  %v1233 = vpop.f32.mrf.mxu0
  %1234 = vdwg.mxu0
  %v1248 = vrot.slane %v1202, 1
  %v1249 = vrot.slane %v1202, 2
  %v1250 = vrot.slane %v1202, 3
  %v1251 = vrot.slane %v1202, 4
  %v1252 = vrot.slane %v1202, 5
  %v1253 = vrot.slane %v1202, 6
  %v1254 = vrot.slane %v1202, 7
  %v1255 = vrot.slane %v1204, 1
  %v1256 = vrot.slane %v1204, 2
  %v1257 = vrot.slane %v1204, 3
  %v1258 = vrot.slane %v1204, 4
  %v1259 = vrot.slane %v1204, 5
  %v1260 = vrot.slane %v1204, 6
  %v1261 = vrot.slane %v1204, 7
  %v1262 = vrot.slane %v1207, 1
  %v1263 = vrot.slane %v1207, 2
  %v1264 = vrot.slane %v1207, 3
  %v1265 = vrot.slane %v1207, 4
  %v1266 = vrot.slane %v1207, 5
  %v1267 = vrot.slane %v1207, 6
  %v1268 = vrot.slane %v1207, 7
  %v1269 = vrot.slane %v1209, 1
  %v1270 = vrot.slane %v1209, 2
  %v1271 = vrot.slane %v1209, 3
  %v1272 = vrot.slane %v1209, 4
  %v1273 = vrot.slane %v1209, 5
  %v1274 = vrot.slane %v1209, 6
  %v1275 = vrot.slane %v1209, 7
  %v1276 = vrot.slane %v1212, 1
  %v1277 = vrot.slane %v1212, 2
  %v1278 = vrot.slane %v1212, 3
  %v1279 = vrot.slane %v1212, 4
  %v1280 = vrot.slane %v1212, 5
  %v1281 = vrot.slane %v1212, 6
  %v1282 = vrot.slane %v1212, 7
  %v1283 = vrot.slane %v1214, 1
  %v1284 = vrot.slane %v1214, 2
  %v1285 = vrot.slane %v1214, 3
  %v1286 = vrot.slane %v1214, 4
  %v1287 = vrot.slane %v1214, 5
  %v1288 = vrot.slane %v1214, 6
  %v1289 = vrot.slane %v1214, 7
  %v1290 = vrot.slane %v1217, 1
  %v1291 = vrot.slane %v1217, 2
  %v1292 = vrot.slane %v1217, 3
  %v1293 = vrot.slane %v1217, 4
  %v1294 = vrot.slane %v1217, 5
  %v1295 = vrot.slane %v1217, 6
  %v1296 = vrot.slane %v1217, 7
  %v1297 = vrot.slane %v1219, 1
  %v1298 = vrot.slane %v1219, 2
  %v1299 = vrot.slane %v1219, 3
  %v1300 = vrot.slane %v1219, 4
  %v1301 = vrot.slane %v1219, 5
  %v1302 = vrot.slane %v1219, 6
  %v1303 = vrot.slane %v1219, 7
  %v1304 = vrot.slane %v1222, 1
  %v1305 = vrot.slane %v1222, 2
  %v1306 = vrot.slane %v1222, 3
  %v1307 = vrot.slane %v1222, 4
  %v1308 = vrot.slane %v1222, 5
  %v1309 = vrot.slane %v1222, 6
  %v1310 = vrot.slane %v1222, 7
  %v1311 = vrot.slane %v1224, 1
  %v1312 = vrot.slane %v1224, 2
  %v1313 = vrot.slane %v1224, 3
  %v1314 = vrot.slane %v1224, 4
  %v1315 = vrot.slane %v1224, 5
  %v1316 = vrot.slane %v1224, 6
  %v1317 = vrot.slane %v1224, 7
  %v1318 = vrot.slane %v1227, 1
  %v1319 = vrot.slane %v1227, 2
  %v1320 = vrot.slane %v1227, 3
  %v1321 = vrot.slane %v1227, 4
  %v1322 = vrot.slane %v1227, 5
  %v1323 = vrot.slane %v1227, 6
  %v1324 = vrot.slane %v1227, 7
  %v1325 = vrot.slane %v1229, 1
  %v1326 = vrot.slane %v1229, 2
  %v1327 = vrot.slane %v1229, 3
  %v1328 = vrot.slane %v1229, 4
  %v1329 = vrot.slane %v1229, 5
  %v1330 = vrot.slane %v1229, 6
  %v1331 = vrot.slane %v1229, 7
  %v1332 = vrot.slane %v1232, 1
  %v1333 = vrot.slane %v1232, 2
  %v1334 = vrot.slane %v1232, 3
  %v1335 = vrot.slane %v1232, 4
  %v1336 = vrot.slane %v1232, 5
  %v1337 = vrot.slane %v1232, 6
  %v1338 = vrot.slane %v1232, 7
  %1339 = vst [vmem:[#allocation1] ss:$9 sm:$0xff] %v1202
  %s1340 = scalar_lea.vmem [#allocation1], 1
  %1341 = vst [vmem:[%s1340] ss:$9 sm:$0xff] %v1248
  %s1342 = scalar_lea.vmem [#allocation1], 2
  %1343 = vst [vmem:[%s1342] ss:$9 sm:$0xff] %v1249
  %s1344 = scalar_lea.vmem [#allocation1], 3
  %1345 = vst [vmem:[%s1344] ss:$9 sm:$0xff] %v1250
  %s1346 = scalar_lea.vmem [#allocation1], 4
  %1347 = vst [vmem:[%s1346] ss:$9 sm:$0xff] %v1251
  %s1348 = scalar_lea.vmem [#allocation1], 5
  %1349 = vst [vmem:[%s1348] ss:$9 sm:$0xff] %v1252
  %s1350 = scalar_lea.vmem [#allocation1], 6
  %1351 = vst [vmem:[%s1350] ss:$9 sm:$0xff] %v1253
  %s1352 = scalar_lea.vmem [#allocation1], 7
  %1353 = vst [vmem:[%s1352] ss:$9 sm:$0xff] %v1254
  %v1354 = vld [vmem:[#allocation1] sm:$0xff]
  %1355 = vst [vmem:[#allocation1] ss:$9 sm:$0xff] %v1204
  %1356 = vst [vmem:[%s1340] ss:$9 sm:$0xff] %v1255
  %1357 = vst [vmem:[%s1342] ss:$9 sm:$0xff] %v1256
  %1358 = vst [vmem:[%s1344] ss:$9 sm:$0xff] %v1257
  %1359 = vst [vmem:[%s1346] ss:$9 sm:$0xff] %v1258
  %v1360 = vld [vmem:[#allocation1] sm:$0xff]
  %1361 = vst [vmem:[#allocation1] ss:$9 sm:$0xff] %v1259
  %1362 = vst [vmem:[%s1340] ss:$9 sm:$0xff] %v1260
  %1363 = vst [vmem:[%s1342] ss:$9 sm:$0xff] %v1261
  %1364 = vst [vmem:[%s1344] ss:$9 sm:$0xff] %v1207
  %1365 = vst [vmem:[%s1346] ss:$9 sm:$0xff] %v1262
  %1366 = vst [vmem:[%s1348] ss:$9 sm:$0xff] %v1263
  %1367 = vst [vmem:[%s1350] ss:$9 sm:$0xff] %v1264
  %1368 = vst [vmem:[%s1352] ss:$9 sm:$0xff] %v1265
  %v1369 = vld [vmem:[#allocation1] sm:$0xff]
  %1370 = vst [vmem:[#allocation1] ss:$9 sm:$0xff] %v1266
  %1371 = vst [vmem:[%s1340] ss:$9 sm:$0xff] %v1267
  %1372 = vst [vmem:[%s1342] ss:$9 sm:$0xff] %v1268
  %1373 = vst [vmem:[%s1344] ss:$9 sm:$0xff] %v1209
  %1374 = vst [vmem:[%s1346] ss:$9 sm:$0xff] %v1269
  %v1375 = vld [vmem:[#allocation1] sm:$0xff]
  %1376 = vst [vmem:[#allocation1] ss:$9 sm:$0xff] %v1270
  %1377 = vst [vmem:[%s1340] ss:$9 sm:$0xff] %v1271
  %1378 = vst [vmem:[%s1342] ss:$9 sm:$0xff] %v1272
  %1379 = vst [vmem:[%s1344] ss:$9 sm:$0xff] %v1273
  %1380 = vst [vmem:[%s1346] ss:$9 sm:$0xff] %v1274
  %1381 = vst [vmem:[%s1348] ss:$9 sm:$0xff] %v1275
  %1382 = vst [vmem:[%s1350] ss:$9 sm:$0xff] %v1212
  %1383 = vst [vmem:[%s1352] ss:$9 sm:$0xff] %v1276
  %v1384 = vld [vmem:[#allocation1] sm:$0xff]
  %1385 = vst [vmem:[#allocation1] ss:$9 sm:$0xff] %v1277
  %1386 = vst [vmem:[%s1340] ss:$9 sm:$0xff] %v1278
  %1387 = vst [vmem:[%s1342] ss:$9 sm:$0xff] %v1279
  %1388 = vst [vmem:[%s1344] ss:$9 sm:$0xff] %v1280
  %1389 = vst [vmem:[%s1346] ss:$9 sm:$0xff] %v1281
  %v1390 = vld [vmem:[#allocation1] sm:$0xff]
  %1391 = vst [vmem:[#allocation1] ss:$9 sm:$0xff] %v1282
  %1392 = vst [vmem:[%s1340] ss:$9 sm:$0xff] %v1214
  %1393 = vst [vmem:[%s1342] ss:$9 sm:$0xff] %v1283
  %1394 = vst [vmem:[%s1344] ss:$9 sm:$0xff] %v1284
  %1395 = vst [vmem:[%s1346] ss:$9 sm:$0xff] %v1285
  %1396 = vst [vmem:[%s1348] ss:$9 sm:$0xff] %v1286
  %1397 = vst [vmem:[%s1350] ss:$9 sm:$0xff] %v1287
  %1398 = vst [vmem:[%s1352] ss:$9 sm:$0xff] %v1288
  %v1399 = vld [vmem:[#allocation1] sm:$0xff]
  %1400 = vst [vmem:[#allocation1] ss:$9 sm:$0xff] %v1289
  %1401 = vst [vmem:[%s1340] ss:$9 sm:$0xff] %v1217
  %1402 = vst [vmem:[%s1342] ss:$9 sm:$0xff] %v1290
  %1403 = vst [vmem:[%s1344] ss:$9 sm:$0xff] %v1291
  %1404 = vst [vmem:[%s1346] ss:$9 sm:$0xff] %v1292
  %v1405 = vld [vmem:[#allocation1] sm:$0xff]
  %1406 = vst [vmem:[#allocation1] ss:$9 sm:$0xff] %v1293
  %1407 = vst [vmem:[%s1340] ss:$9 sm:$0xff] %v1294
  %1408 = vst [vmem:[%s1342] ss:$9 sm:$0xff] %v1295
  %1409 = vst [vmem:[%s1344] ss:$9 sm:$0xff] %v1296
  %1410 = vst [vmem:[%s1346] ss:$9 sm:$0xff] %v1219
  %1411 = vst [vmem:[%s1348] ss:$9 sm:$0xff] %v1297
  %1412 = vst [vmem:[%s1350] ss:$9 sm:$0xff] %v1298
  %1413 = vst [vmem:[%s1352] ss:$9 sm:$0xff] %v1299
  %v1414 = vld [vmem:[#allocation1] sm:$0xff]
  %1415 = vst [vmem:[#allocation1] ss:$9 sm:$0xff] %v1300
  %1416 = vst [vmem:[%s1340] ss:$9 sm:$0xff] %v1301
  %1417 = vst [vmem:[%s1342] ss:$9 sm:$0xff] %v1302
  %1418 = vst [vmem:[%s1344] ss:$9 sm:$0xff] %v1303
  %1419 = vst [vmem:[%s1346] ss:$9 sm:$0xff] %v1222
  %v1420 = vld [vmem:[#allocation1] sm:$0xff]
  %1421 = vst [vmem:[#allocation1] ss:$9 sm:$0xff] %v1304
  %1422 = vst [vmem:[%s1340] ss:$9 sm:$0xff] %v1305
  %1423 = vst [vmem:[%s1342] ss:$9 sm:$0xff] %v1306
  %1424 = vst [vmem:[%s1344] ss:$9 sm:$0xff] %v1307
  %1425 = vst [vmem:[%s1346] ss:$9 sm:$0xff] %v1308
  %1426 = vst [vmem:[%s1348] ss:$9 sm:$0xff] %v1309
  %1427 = vst [vmem:[%s1350] ss:$9 sm:$0xff] %v1310
  %1428 = vst [vmem:[%s1352] ss:$9 sm:$0xff] %v1224
  %v1429 = vld [vmem:[#allocation1] sm:$0xff]
  %1430 = vst [vmem:[#allocation1] ss:$9 sm:$0xff] %v1311
  %1431 = vst [vmem:[%s1340] ss:$9 sm:$0xff] %v1312
  %1432 = vst [vmem:[%s1342] ss:$9 sm:$0xff] %v1313
  %1433 = vst [vmem:[%s1344] ss:$9 sm:$0xff] %v1314
  %1434 = vst [vmem:[%s1346] ss:$9 sm:$0xff] %v1315
  %v1435 = vld [vmem:[#allocation1] sm:$0xff]
  %1436 = vst [vmem:[#allocation1] ss:$9 sm:$0xff] %v1316
  %1437 = vst [vmem:[%s1340] ss:$9 sm:$0xff] %v1317
  %1438 = vst [vmem:[%s1342] ss:$9 sm:$0xff] %v1227
  %1439 = vst [vmem:[%s1344] ss:$9 sm:$0xff] %v1318
  %1440 = vst [vmem:[%s1346] ss:$9 sm:$0xff] %v1319
  %1441 = vst [vmem:[%s1348] ss:$9 sm:$0xff] %v1320
  %1442 = vst [vmem:[%s1350] ss:$9 sm:$0xff] %v1321
  %1443 = vst [vmem:[%s1352] ss:$9 sm:$0xff] %v1322
  %v1444 = vld [vmem:[#allocation1] sm:$0xff]
  %1445 = vst [vmem:[#allocation1] ss:$9 sm:$0xff] %v1323
  %1446 = vst [vmem:[%s1340] ss:$9 sm:$0xff] %v1324
  %1447 = vst [vmem:[%s1342] ss:$9 sm:$0xff] %v1229
  %1448 = vst [vmem:[%s1344] ss:$9 sm:$0xff] %v1325
  %1449 = vst [vmem:[%s1346] ss:$9 sm:$0xff] %v1326
  %v1450 = vld [vmem:[#allocation1] sm:$0xff]
  %1451 = vst [vmem:[#allocation1] ss:$9 sm:$0xff] %v1327
  %1452 = vst [vmem:[%s1340] ss:$9 sm:$0xff] %v1328
  %1453 = vst [vmem:[%s1342] ss:$9 sm:$0xff] %v1329
  %1454 = vst [vmem:[%s1344] ss:$9 sm:$0xff] %v1330
  %1455 = vst [vmem:[%s1346] ss:$9 sm:$0xff] %v1331
  %1456 = vst [vmem:[%s1348] ss:$9 sm:$0xff] %v1232
  %1457 = vst [vmem:[%s1350] ss:$9 sm:$0xff] %v1332
  %1458 = vst [vmem:[%s1352] ss:$9 sm:$0xff] %v1333
  %v1459 = vld [vmem:[#allocation1] sm:$0xff]
  %1460 = vst [vmem:[#allocation1] ss:$9 sm:$0xff] %v1334
  %1461 = vst [vmem:[%s1340] ss:$9 sm:$0xff] %v1335
  %1462 = vst [vmem:[%s1342] ss:$9 sm:$0xff] %v1336
  %1463 = vst [vmem:[%s1344] ss:$9 sm:$0xff] %v1337
  %1464 = vst [vmem:[%s1346] ss:$9 sm:$0xff] %v1338
  %v1465 = vld [vmem:[#allocation1] sm:$0xff]
  %vm1482 = vcmask 1044480
  %v1483 = vsel %vm1482, %v1360, -inf
  %v1484 = vmax.f32 %v1354, %v1483
  %v1485 = vrot.slane %v1484, 4
  %v1486 = vmax.f32 %v1484, %v1485
  %v1487 = vrot.slane %v1486, 2
  %v1488 = vmax.f32 %v1486, %v1487
  %v1489 = vrot.slane %v1488, 1
  %v1490 = vmax.f32 %v1488, %v1489
  %v1491 = vsel %vm1482, %v1375, -inf
  %v1492 = vmax.f32 %v1369, %v1491
  %v1493 = vrot.slane %v1492, 4
  %v1494 = vmax.f32 %v1492, %v1493
  %v1495 = vrot.slane %v1494, 2
  %v1496 = vmax.f32 %v1494, %v1495
  %v1497 = vrot.slane %v1496, 1
  %v1498 = vmax.f32 %v1496, %v1497
  %v1499 = vsel %vm1482, %v1390, -inf
  %v1500 = vmax.f32 %v1384, %v1499
  %v1501 = vrot.slane %v1500, 4
  %v1502 = vmax.f32 %v1500, %v1501
  %v1503 = vrot.slane %v1502, 2
  %v1504 = vmax.f32 %v1502, %v1503
  %v1505 = vrot.slane %v1504, 1
  %v1506 = vmax.f32 %v1504, %v1505
  %v1507 = vsel %vm1482, %v1405, -inf
  %v1508 = vmax.f32 %v1399, %v1507
  %v1509 = vrot.slane %v1508, 4
  %v1510 = vmax.f32 %v1508, %v1509
  %v1511 = vrot.slane %v1510, 2
  %v1512 = vmax.f32 %v1510, %v1511
  %v1513 = vrot.slane %v1512, 1
  %v1514 = vmax.f32 %v1512, %v1513
  %v1515 = vsel %vm1482, %v1420, -inf
  %v1516 = vmax.f32 %v1414, %v1515
  %v1517 = vrot.slane %v1516, 4
  %v1518 = vmax.f32 %v1516, %v1517
  %v1519 = vrot.slane %v1518, 2
  %v1520 = vmax.f32 %v1518, %v1519
  %v1521 = vrot.slane %v1520, 1
  %v1522 = vmax.f32 %v1520, %v1521
  %v1523 = vsel %vm1482, %v1435, -inf
  %v1524 = vmax.f32 %v1429, %v1523
  %v1525 = vrot.slane %v1524, 4
  %v1526 = vmax.f32 %v1524, %v1525
  %v1527 = vrot.slane %v1526, 2
  %v1528 = vmax.f32 %v1526, %v1527
  %v1529 = vrot.slane %v1528, 1
  %v1530 = vmax.f32 %v1528, %v1529
  %v1531 = vsel %vm1482, %v1450, -inf
  %v1532 = vmax.f32 %v1444, %v1531
  %v1533 = vrot.slane %v1532, 4
  %v1534 = vmax.f32 %v1532, %v1533
  %v1535 = vrot.slane %v1534, 2
  %v1536 = vmax.f32 %v1534, %v1535
  %v1537 = vrot.slane %v1536, 1
  %v1538 = vmax.f32 %v1536, %v1537
  %v1539 = vsel %vm1482, %v1465, -inf
  %v1540 = vmax.f32 %v1459, %v1539
  %v1541 = vrot.slane %v1540, 4
  %v1542 = vmax.f32 %v1540, %v1541
  %v1543 = vrot.slane %v1542, 2
  %v1544 = vmax.f32 %v1542, %v1543
  %v1545 = vrot.slane %v1544, 1
  %v1546 = vmax.f32 %v1544, %v1545
  %v1547 = vld [vmem:[%s4] sm:$0x1]
  %v1549 = vperm.slane %v1547, 0
  %v1551 = vadd.f32 %v1490, %v1549
  %v1552 = vadd.f32 %v1498, %v1549
  %v1553 = vadd.f32 %v1506, %v1549
  %v1554 = vadd.f32 %v1514, %v1549
  %v1555 = vadd.f32 %v1522, %v1549
  %v1556 = vadd.f32 %v1530, %v1549
  %v1557 = vadd.f32 %v1538, %v1549
  %v1558 = vadd.f32 %v1546, %v1549
  %v1559 = vmax.f32 %v1551, 0.0
  %v1560 = vmax.f32 %v1552, 0.0
  %v1561 = vmax.f32 %v1553, 0.0
  %v1562 = vmax.f32 %v1554, 0.0
  %v1563 = vmax.f32 %v1555, 0.0
  %v1564 = vmax.f32 %v1556, 0.0
  %v1565 = vmax.f32 %v1557, 0.0
  %v1566 = vmax.f32 %v1558, 0.0
  %v1567 = vrot.slane %v81, 2
  %v1568 = vrot.slane %v82, 2
  %v1569 = vrot.slane %v83, 2
  %v1570 = vrot.slane %v84, 2
  %v1571 = vrot.slane %v85, 2
  %v1572 = vrot.slane %v86, 2
  %v1573 = vrot.slane %v87, 2
  %v1574 = vrot.slane %v88, 2
  %v1575 = vrot.slane %v1567, 6
  %v1576 = vrot.slane %v1568, 6
  %v1577 = vrot.slane %v1569, 6
  %v1578 = vrot.slane %v1570, 6
  %v1579 = vrot.slane %v1571, 6
  %v1580 = vrot.slane %v1572, 6
  %v1581 = vrot.slane %v1573, 6
  %v1582 = vrot.slane %v1574, 6
  %vm1583 = vcmask 1041408
  %v1585 = vsel %vm1583, %v776, %v1575
  %vm1586 = vcmask 1043458
  %v1587 = vsel %vm1586, %v776, %v1575
  %v1589 = vrot.slane %v1587, 2
  %vm1590 = vcmask 1045508
  %v1591 = vsel %vm1590, %v776, %v1575
  %v1593 = vrot.slane %v1591, 4
  %v1595 = vsel %vm1583, %v778, %v1576
  %v1596 = vsel %vm1586, %v778, %v1576
  %v1598 = vrot.slane %v1596, 2
  %v1599 = vsel %vm1590, %v778, %v1576
  %v1601 = vrot.slane %v1599, 4
  %v1603 = vsel %vm1583, %v780, %v1577
  %v1604 = vsel %vm1586, %v780, %v1577
  %v1606 = vrot.slane %v1604, 2
  %v1607 = vsel %vm1590, %v780, %v1577
  %v1609 = vrot.slane %v1607, 4
  %v1611 = vsel %vm1583, %v782, %v1578
  %v1612 = vsel %vm1586, %v782, %v1578
  %v1614 = vrot.slane %v1612, 2
  %v1615 = vsel %vm1590, %v782, %v1578
  %v1617 = vrot.slane %v1615, 4
  %v1619 = vsel %vm1583, %v784, %v1579
  %v1620 = vsel %vm1586, %v784, %v1579
  %v1622 = vrot.slane %v1620, 2
  %v1623 = vsel %vm1590, %v784, %v1579
  %v1625 = vrot.slane %v1623, 4
  %v1627 = vsel %vm1583, %v786, %v1580
  %v1628 = vsel %vm1586, %v786, %v1580
  %v1630 = vrot.slane %v1628, 2
  %v1631 = vsel %vm1590, %v786, %v1580
  %v1633 = vrot.slane %v1631, 4
  %v1635 = vsel %vm1583, %v788, %v1581
  %v1636 = vsel %vm1586, %v788, %v1581
  %v1638 = vrot.slane %v1636, 2
  %v1639 = vsel %vm1590, %v788, %v1581
  %v1641 = vrot.slane %v1639, 4
  %v1643 = vsel %vm1583, %v790, %v1582
  %v1644 = vsel %vm1586, %v790, %v1582
  %v1646 = vrot.slane %v1644, 2
  %v1647 = vsel %vm1590, %v790, %v1582
  %v1649 = vrot.slane %v1647, 4
  %v1650 = vld [vmem:[%s5] sm:$0xf]
  %v1651 = vld [vmem:[%s5 + $0x4] sm:$0xf]
  %v1652 = vld [vmem:[%s5 + $0x8] sm:$0xf]
  %v1653 = vld [vmem:[%s5 + $0xc] sm:$0xf]
  %v1654 = vld [vmem:[%s5 + $0x10] sm:$0xf]
  %v1655 = vld [vmem:[%s5 + $0x14] sm:$0xf]
  %v1656 = vld [vmem:[%s5 + $0x18] sm:$0xf]
  %v1657 = vld [vmem:[%s5 + $0x1c] sm:$0xf]
  %v1658 = vld [vmem:[%s5 + $0x20] sm:$0xf]
  %v1659 = vld [vmem:[%s5 + $0x24] sm:$0xf]
  %v1660 = vld [vmem:[%s5 + $0x28] sm:$0xf]
  %v1661 = vld [vmem:[%s5 + $0x2c] sm:$0xf]
  %v1662 = vld [vmem:[%s5 + $0x30] sm:$0xf]
  %v1663 = vld [vmem:[%s5 + $0x34] sm:$0xf]
  %v1664 = vld [vmem:[%s5 + $0x38] sm:$0xf]
  %v1665 = vld [vmem:[%s5 + $0x3c] sm:$0xf]
  %v1666 = vld [vmem:[%s5 + $0x40] sm:$0xf]
  %v1667 = vld [vmem:[%s5 + $0x44] sm:$0xf]
  %v1668 = vld [vmem:[%s5 + $0x48] sm:$0xf]
  %v1669 = vld [vmem:[%s5 + $0x4c] sm:$0xf]
  %1670 = vst [vmem:[#allocation1] ss:$4 sm:$0xff] %v1585
  %s1672 = scalar_lea.vmem [#allocation1], 1
  %1673 = vst [vmem:[%s1672] ss:$4 sm:$0xff] %v1589
  %s1675 = scalar_lea.vmem [#allocation1], 2
  %1676 = vst [vmem:[%s1675] ss:$4 sm:$0xff] %v1593
  %s1677 = scalar_lea.vmem [#allocation1], 3
  %1678 = vst [vmem:[%s1677] ss:$4 sm:$0xff] %v1595
  %s1680 = scalar_lea.vmem [#allocation1], 32
  %1681 = vst [vmem:[%s1680] ss:$4 sm:$0xff] %v1598
  %s1683 = scalar_lea.vmem [#allocation1], 33
  %1684 = vst [vmem:[%s1683] ss:$4 sm:$0xff] %v1601
  %s1685 = scalar_lea.vmem [#allocation1], 34
  %1686 = vst [vmem:[%s1685] ss:$4 sm:$0xff] %v1603
  %s1688 = scalar_lea.vmem [#allocation1], 35
  %1689 = vst [vmem:[%s1688] ss:$4 sm:$0xff] %v1606
  %v1690 = vld.sshfl [vmem:[#allocation1] sm:$0xff pattern:$0x73625140]
  %v1691 = vld.sshfl [vmem:[#allocation1 + $0x8] sm:$0xff pattern:$0x73625140]
  %v1692 = vld.sshfl [vmem:[#allocation1 + $0x20] sm:$0xff pattern:$0x73625140]
  %v1693 = vld.sshfl [vmem:[#allocation1 + $0x28] sm:$0xff pattern:$0x73625140]
  %1695 = vst [vmem:[#allocation1] ss:$4 sm:$0xff] %v1609
  %1696 = vst [vmem:[%s1672] ss:$4 sm:$0xff] %v1611
  %1698 = vst [vmem:[%s1675] ss:$4 sm:$0xff] %v1614
  %1700 = vst [vmem:[%s1677] ss:$4 sm:$0xff] %v1617
  %1701 = vst [vmem:[%s1680] ss:$4 sm:$0xff] %v1619
  %1703 = vst [vmem:[%s1683] ss:$4 sm:$0xff] %v1622
  %1705 = vst [vmem:[%s1685] ss:$4 sm:$0xff] %v1625
  %1706 = vst [vmem:[%s1688] ss:$4 sm:$0xff] %v1627
  %v1707 = vld.sshfl [vmem:[#allocation1] sm:$0xff pattern:$0x73625140]
  %v1708 = vld.sshfl [vmem:[#allocation1 + $0x8] sm:$0xff pattern:$0x73625140]
  %v1709 = vld.sshfl [vmem:[#allocation1 + $0x20] sm:$0xff pattern:$0x73625140]
  %v1710 = vld.sshfl [vmem:[#allocation1 + $0x28] sm:$0xff pattern:$0x73625140]
  %1712 = vst [vmem:[#allocation1] ss:$4 sm:$0xff] %v1630
  %1714 = vst [vmem:[%s1672] ss:$4 sm:$0xff] %v1633
  %1715 = vst [vmem:[%s1675] ss:$4 sm:$0xff] %v1635
  %1717 = vst [vmem:[%s1677] ss:$4 sm:$0xff] %v1638
  %1719 = vst [vmem:[%s1680] ss:$4 sm:$0xff] %v1641
  %1720 = vst [vmem:[%s1683] ss:$4 sm:$0xff] %v1643
  %1722 = vst [vmem:[%s1685] ss:$4 sm:$0xff] %v1646
  %1724 = vst [vmem:[%s1688] ss:$4 sm:$0xff] %v1649
  %v1725 = vld.sshfl [vmem:[#allocation1] sm:$0xff pattern:$0x73625140]
  %v1726 = vld.sshfl [vmem:[#allocation1 + $0x8] sm:$0xff pattern:$0x73625140]
  %v1727 = vld.sshfl [vmem:[#allocation1 + $0x20] sm:$0xff pattern:$0x73625140]
  %v1728 = vld.sshfl [vmem:[#allocation1 + $0x28] sm:$0xff pattern:$0x73625140]
  %v1755 = vunpack.c.l.b16 %v1650
  %v1756 = vunpack.c.l.b16 %v1651
  %v1757 = vunpack.c.l.b16 %v1652
  %v1758 = vunpack.c.l.b16 %v1653
  %v1759 = vunpack.c.l.b16 %v1654
  %v1760 = vunpack.c.l.b16 %v1655
  %v1761 = vunpack.c.l.b16 %v1656
  %v1762 = vunpack.c.l.b16 %v1657
  %v1763 = vunpack.c.l.b16 %v1658
  %v1764 = vunpack.c.l.b16 %v1659
  %v1765 = vunpack.c.l.b16 %v1660
  %v1766 = vunpack.c.l.b16 %v1661
  %v1767 = vunpack.c.l.b16 %v1662
  %v1768 = vunpack.c.l.b16 %v1663
  %v1769 = vunpack.c.l.b16 %v1664
  %v1770 = vunpack.c.l.b16 %v1665
  %v1771 = vunpack.c.l.b16 %v1666
  %v1772 = vunpack.c.l.b16 %v1667
  %v1773 = vunpack.c.l.b16 %v1668
  %v1774 = vunpack.c.l.b16 %v1669
  %v1775 = vpack.c.b16 %v1756, %v1755
  %v1776 = vpack.c.b16 %v1758, %v1757
  %v1777 = vpack.c.b16 %v1760, %v1759
  %v1778 = vpack.c.b16 %v1762, %v1761
  %v1779 = vpack.c.b16 %v1764, %v1763
  %v1780 = vpack.c.b16 %v1766, %v1765
  %v1781 = vpack.c.b16 %v1768, %v1767
  %v1782 = vpack.c.b16 %v1770, %v1769
  %v1783 = vpack.c.b16 %v1772, %v1771
  %v1784 = vpack.c.b16 %v1774, %v1773
  %v1795 = vsel %vm185, %v1691, 0
  %v1797 = vsel %vm185, %v1693, 0
  %v1799 = vsel %vm185, %v1708, 0
  %v1801 = vsel %vm185, %v1710, 0
  %v1803 = vsel %vm185, %v1726, 0
  %v1805 = vsel %vm185, %v1728, 0
  %1807 = vmatpush.bf16.msra.mxu0 %v1782
  %1808 = vmatpush.bf16.msra.mxu0 %v1781
  %1809 = vmatpush.bf16.msra.mxu0 %v1780
  %1810 = vmatpush.bf16.msra.mxu0 %v1779
  %1811 = vmatpush.bf16.msra.mxu0 %v1778
  %1812 = vmatpush.bf16.msra.mxu0 %v1777
  %1813 = vmatpush.bf16.msra.mxu0 %v1776
  %1814 = vmatpush.bf16.msra.mxu0 %v1775
  %1815 = vmatmul.bf16.gmra.mxu0 %v1690
  %v1816 = vpop.f32.mrf.mxu0
  %v1817 = vadd.f32 0.0, %v1816
  %v1818 = vpop.f32.mrf.mxu0
  %v1819 = vadd.f32 0.0, %v1818
  %1820 = vmatmul.bf16.gmra.mxu0 %v1692
  %v1821 = vpop.f32.mrf.mxu0
  %v1822 = vadd.f32 0.0, %v1821
  %v1823 = vpop.f32.mrf.mxu0
  %v1824 = vadd.f32 0.0, %v1823
  %1825 = vmatmul.bf16.gmra.mxu0 %v1707
  %v1826 = vpop.f32.mrf.mxu0
  %v1827 = vadd.f32 0.0, %v1826
  %v1828 = vpop.f32.mrf.mxu0
  %v1829 = vadd.f32 0.0, %v1828
  %1830 = vmatmul.bf16.gmra.mxu0 %v1709
  %v1831 = vpop.f32.mrf.mxu0
  %v1832 = vadd.f32 0.0, %v1831
  %v1833 = vpop.f32.mrf.mxu0
  %v1834 = vadd.f32 0.0, %v1833
  %1835 = vmatmul.bf16.gmra.mxu0 %v1725
  %v1836 = vpop.f32.mrf.mxu0
  %v1837 = vadd.f32 0.0, %v1836
  %v1838 = vpop.f32.mrf.mxu0
  %v1839 = vadd.f32 0.0, %v1838
  %1840 = vmatmul.bf16.gmra.mxu0 %v1727
  %v1841 = vpop.f32.mrf.mxu0
  %v1842 = vadd.f32 0.0, %v1841
  %v1843 = vpop.f32.mrf.mxu0
  %v1844 = vadd.f32 0.0, %v1843
  %1845 = vdwg.mxu0
  %1846 = vmatpush.bf16.msra.mxu0 0
  %1847 = vmatpush.bf16.msra.mxu0 0
  %1848 = vmatpush.bf16.msra.mxu0 0
  %1849 = vmatpush.bf16.msra.mxu0 0
  %1850 = vmatpush.bf16.msra.mxu0 0
  %1851 = vmatpush.bf16.msra.mxu0 0
  %1852 = vmatpush.bf16.msra.mxu0 %v1784
  %1853 = vmatpush.bf16.msra.mxu0 %v1783
  %1854 = vmatmul.bf16.gmra.mxu0 %v1795
  %v1855 = vpop.f32.mrf.mxu0
  %v1856 = vadd.f32 %v1817, %v1855
  %v1857 = vpop.f32.mrf.mxu0
  %v1858 = vadd.f32 %v1819, %v1857
  %1859 = vmatmul.bf16.gmra.mxu0 %v1797
  %v1860 = vpop.f32.mrf.mxu0
  %v1861 = vadd.f32 %v1822, %v1860
  %v1862 = vpop.f32.mrf.mxu0
  %v1863 = vadd.f32 %v1824, %v1862
  %1864 = vmatmul.bf16.gmra.mxu0 %v1799
  %v1865 = vpop.f32.mrf.mxu0
  %v1866 = vadd.f32 %v1827, %v1865
  %v1867 = vpop.f32.mrf.mxu0
  %v1868 = vadd.f32 %v1829, %v1867
  %1869 = vmatmul.bf16.gmra.mxu0 %v1801
  %v1870 = vpop.f32.mrf.mxu0
  %v1871 = vadd.f32 %v1832, %v1870
  %v1872 = vpop.f32.mrf.mxu0
  %v1873 = vadd.f32 %v1834, %v1872
  %1874 = vmatmul.bf16.gmra.mxu0 %v1803
  %v1875 = vpop.f32.mrf.mxu0
  %v1876 = vadd.f32 %v1837, %v1875
  %v1877 = vpop.f32.mrf.mxu0
  %v1878 = vadd.f32 %v1839, %v1877
  %1879 = vmatmul.bf16.gmra.mxu0 %v1805
  %v1880 = vpop.f32.mrf.mxu0
  %v1881 = vadd.f32 %v1842, %v1880
  %v1882 = vpop.f32.mrf.mxu0
  %v1883 = vadd.f32 %v1844, %v1882
  %1884 = vdwg.mxu0
  %v1897 = vrot.slane %v1856, 4
  %v1898 = vrot.slane %v1858, 4
  %v1899 = vrot.slane %v1861, 4
  %v1900 = vrot.slane %v1863, 4
  %v1901 = vrot.slane %v1866, 4
  %v1902 = vrot.slane %v1868, 4
  %v1903 = vrot.slane %v1871, 4
  %v1904 = vrot.slane %v1873, 4
  %v1905 = vrot.slane %v1876, 4
  %v1906 = vrot.slane %v1878, 4
  %v1907 = vrot.slane %v1881, 4
  %v1908 = vrot.slane %v1883, 4
  %1909 = vst [vmem:[#allocation1] ss:$2 sm:$0xff] %v1856
  %s1910 = scalar_lea.vmem [#allocation1], 1
  %1911 = vst [vmem:[%s1910] ss:$2 sm:$0xff] %v1897
  %s1912 = scalar_lea.vmem [#allocation1], 16
  %1913 = vst [vmem:[%s1912] ss:$2 sm:$0xff] %v1858
  %v1914 = vld.sshfl [vmem:[#allocation1] sm:$0xff pattern:$0x75316420]
  %v1915 = vld.sshfl [vmem:[#allocation1 + $0x10] sm:$0xff pattern:$0x75316420]
  %s1916 = scalar_lea.vmem [#allocation1], 32
  %1917 = vst [vmem:[%s1916] ss:$2 sm:$0xff] %v1898
  %s1918 = scalar_lea.vmem [#allocation1], 33
  %1919 = vst [vmem:[%s1918] ss:$2 sm:$0xff] %v1861
  %s1920 = scalar_lea.vmem [#allocation1], 48
  %1921 = vst [vmem:[%s1920] ss:$2 sm:$0xff] %v1899
  %v1922 = vld.sshfl [vmem:[#allocation1 + $0x20] sm:$0xff pattern:$0x75316420]
  %v1923 = vld.sshfl [vmem:[#allocation1 + $0x30] sm:$0xff pattern:$0x75316420]
  %1924 = vst [vmem:[#allocation1] ss:$2 sm:$0xff] %v1863
  %1925 = vst [vmem:[%s1910] ss:$2 sm:$0xff] %v1900
  %1926 = vst [vmem:[%s1912] ss:$2 sm:$0xff] %v1866
  %v1927 = vld.sshfl [vmem:[#allocation1] sm:$0xff pattern:$0x75316420]
  %v1928 = vld.sshfl [vmem:[#allocation1 + $0x10] sm:$0xff pattern:$0x75316420]
  %1929 = vst [vmem:[%s1916] ss:$2 sm:$0xff] %v1901
  %1930 = vst [vmem:[%s1918] ss:$2 sm:$0xff] %v1868
  %1931 = vst [vmem:[%s1920] ss:$2 sm:$0xff] %v1902
  %v1932 = vld.sshfl [vmem:[#allocation1 + $0x20] sm:$0xff pattern:$0x75316420]
  %v1933 = vld.sshfl [vmem:[#allocation1 + $0x30] sm:$0xff pattern:$0x75316420]
  %1934 = vst [vmem:[#allocation1] ss:$2 sm:$0xff] %v1871
  %1935 = vst [vmem:[%s1910] ss:$2 sm:$0xff] %v1903
  %1936 = vst [vmem:[%s1912] ss:$2 sm:$0xff] %v1873
  %v1937 = vld.sshfl [vmem:[#allocation1] sm:$0xff pattern:$0x75316420]
  %v1938 = vld.sshfl [vmem:[#allocation1 + $0x10] sm:$0xff pattern:$0x75316420]
  %1939 = vst [vmem:[%s1916] ss:$2 sm:$0xff] %v1904
  %1940 = vst [vmem:[%s1918] ss:$2 sm:$0xff] %v1876
  %1941 = vst [vmem:[%s1920] ss:$2 sm:$0xff] %v1905
  %v1942 = vld.sshfl [vmem:[#allocation1 + $0x20] sm:$0xff pattern:$0x75316420]
  %v1943 = vld.sshfl [vmem:[#allocation1 + $0x30] sm:$0xff pattern:$0x75316420]
  %1944 = vst [vmem:[#allocation1] ss:$2 sm:$0xff] %v1878
  %1945 = vst [vmem:[%s1910] ss:$2 sm:$0xff] %v1906
  %1946 = vst [vmem:[%s1912] ss:$2 sm:$0xff] %v1881
  %v1947 = vld.sshfl [vmem:[#allocation1] sm:$0xff pattern:$0x75316420]
  %v1948 = vld.sshfl [vmem:[#allocation1 + $0x10] sm:$0xff pattern:$0x75316420]
  %1949 = vst [vmem:[%s1916] ss:$2 sm:$0xff] %v1907
  %1950 = vst [vmem:[%s1918] ss:$2 sm:$0xff] %v1883
  %1951 = vst [vmem:[%s1920] ss:$2 sm:$0xff] %v1908
  %v1952 = vld.sshfl [vmem:[#allocation1 + $0x20] sm:$0xff pattern:$0x75316420]
  %v1953 = vld.sshfl [vmem:[#allocation1 + $0x30] sm:$0xff pattern:$0x75316420]
  %vm1970 = vcmask 1043456
  %v1971 = vsel %vm1970, %v1915, -inf
  %v1972 = vmax.f32 %v1914, %v1971
  %v1973 = vrot.slane %v1972, 4
  %v1974 = vmax.f32 %v1972, %v1973
  %v1975 = vrot.slane %v1974, 2
  %v1976 = vmax.f32 %v1974, %v1975
  %v1977 = vrot.slane %v1976, 1
  %v1978 = vmax.f32 %v1976, %v1977
  %v1979 = vsel %vm1970, %v1923, -inf
  %v1980 = vmax.f32 %v1922, %v1979
  %v1981 = vrot.slane %v1980, 4
  %v1982 = vmax.f32 %v1980, %v1981
  %v1983 = vrot.slane %v1982, 2
  %v1984 = vmax.f32 %v1982, %v1983
  %v1985 = vrot.slane %v1984, 1
  %v1986 = vmax.f32 %v1984, %v1985
  %v1987 = vsel %vm1970, %v1928, -inf
  %v1988 = vmax.f32 %v1927, %v1987
  %v1989 = vrot.slane %v1988, 4
  %v1990 = vmax.f32 %v1988, %v1989
  %v1991 = vrot.slane %v1990, 2
  %v1992 = vmax.f32 %v1990, %v1991
  %v1993 = vrot.slane %v1992, 1
  %v1994 = vmax.f32 %v1992, %v1993
  %v1995 = vsel %vm1970, %v1933, -inf
  %v1996 = vmax.f32 %v1932, %v1995
  %v1997 = vrot.slane %v1996, 4
  %v1998 = vmax.f32 %v1996, %v1997
  %v1999 = vrot.slane %v1998, 2
  %v2000 = vmax.f32 %v1998, %v1999
  %v2001 = vrot.slane %v2000, 1
  %v2002 = vmax.f32 %v2000, %v2001
  %v2003 = vsel %vm1970, %v1938, -inf
  %v2004 = vmax.f32 %v1937, %v2003
  %v2005 = vrot.slane %v2004, 4
  %v2006 = vmax.f32 %v2004, %v2005
  %v2007 = vrot.slane %v2006, 2
  %v2008 = vmax.f32 %v2006, %v2007
  %v2009 = vrot.slane %v2008, 1
  %v2010 = vmax.f32 %v2008, %v2009
  %v2011 = vsel %vm1970, %v1943, -inf
  %v2012 = vmax.f32 %v1942, %v2011
  %v2013 = vrot.slane %v2012, 4
  %v2014 = vmax.f32 %v2012, %v2013
  %v2015 = vrot.slane %v2014, 2
  %v2016 = vmax.f32 %v2014, %v2015
  %v2017 = vrot.slane %v2016, 1
  %v2018 = vmax.f32 %v2016, %v2017
  %v2019 = vsel %vm1970, %v1948, -inf
  %v2020 = vmax.f32 %v1947, %v2019
  %v2021 = vrot.slane %v2020, 4
  %v2022 = vmax.f32 %v2020, %v2021
  %v2023 = vrot.slane %v2022, 2
  %v2024 = vmax.f32 %v2022, %v2023
  %v2025 = vrot.slane %v2024, 1
  %v2026 = vmax.f32 %v2024, %v2025
  %v2027 = vsel %vm1970, %v1953, -inf
  %v2028 = vmax.f32 %v1952, %v2027
  %v2029 = vrot.slane %v2028, 4
  %v2030 = vmax.f32 %v2028, %v2029
  %v2031 = vrot.slane %v2030, 2
  %v2032 = vmax.f32 %v2030, %v2031
  %v2033 = vrot.slane %v2032, 1
  %v2034 = vmax.f32 %v2032, %v2033
  %v2035 = vld [vmem:[%s6] sm:$0x1]
  %v2037 = vperm.slane %v2035, 0
  %v2039 = vadd.f32 %v1978, %v2037
  %v2040 = vadd.f32 %v1986, %v2037
  %v2041 = vadd.f32 %v1994, %v2037
  %v2042 = vadd.f32 %v2002, %v2037
  %v2043 = vadd.f32 %v2010, %v2037
  %v2044 = vadd.f32 %v2018, %v2037
  %v2045 = vadd.f32 %v2026, %v2037
  %v2046 = vadd.f32 %v2034, %v2037
  %v2047 = vmax.f32 %v2039, 0.0
  %v2048 = vmax.f32 %v2040, 0.0
  %v2049 = vmax.f32 %v2041, 0.0
  %v2050 = vmax.f32 %v2042, 0.0
  %v2051 = vmax.f32 %v2043, 0.0
  %v2052 = vmax.f32 %v2044, 0.0
  %v2053 = vmax.f32 %v2045, 0.0
  %v2054 = vmax.f32 %v2046, 0.0
  %v2063 = vrot.slane %v728, 7
  %vm2064 = vcmask 1041409
  %v2065 = vsel %vm2064, %v2063, %v727
  %v2066 = vrot.slane %v729, 6
  %vm2067 = vcmask 1042434
  %v2068 = vsel %vm2067, %v2066, %v2065
  %v2069 = vrot.slane %v730, 5
  %vm2070 = vcmask 1043459
  %v2071 = vsel %vm2070, %v2069, %v2068
  %v2072 = vrot.slane %v731, 4
  %vm2073 = vcmask 1044484
  %v2074 = vsel %vm2073, %v2072, %v2071
  %v2075 = vrot.slane %v732, 3
  %vm2076 = vcmask 1045509
  %v2077 = vsel %vm2076, %v2075, %v2074
  %v2078 = vrot.slane %v733, 2
  %vm2079 = vcmask 1046534
  %v2080 = vsel %vm2079, %v2078, %v2077
  %v2081 = vrot.slane %v734, 1
  %vm2082 = vcmask 1047559
  %v2083 = vsel %vm2082, %v2081, %v2080
  %v2093 = vrot.slane %v1560, 7
  %v2094 = vsel %vm2064, %v2093, %v1559
  %v2095 = vrot.slane %v1561, 6
  %v2096 = vsel %vm2067, %v2095, %v2094
  %v2097 = vrot.slane %v1562, 5
  %v2098 = vsel %vm2070, %v2097, %v2096
  %v2099 = vrot.slane %v1563, 4
  %v2100 = vsel %vm2073, %v2099, %v2098
  %v2101 = vrot.slane %v1564, 3
  %v2102 = vsel %vm2076, %v2101, %v2100
  %v2103 = vrot.slane %v1565, 2
  %v2104 = vsel %vm2079, %v2103, %v2102
  %v2105 = vrot.slane %v1566, 1
  %v2106 = vsel %vm2082, %v2105, %v2104
  %v2116 = vrot.slane %v2048, 7
  %v2117 = vsel %vm2064, %v2116, %v2047
  %v2118 = vrot.slane %v2049, 6
  %v2119 = vsel %vm2067, %v2118, %v2117
  %v2120 = vrot.slane %v2050, 5
  %v2121 = vsel %vm2070, %v2120, %v2119
  %v2122 = vrot.slane %v2051, 4
  %v2123 = vsel %vm2073, %v2122, %v2121
  %v2124 = vrot.slane %v2052, 3
  %v2125 = vsel %vm2076, %v2124, %v2123
  %v2126 = vrot.slane %v2053, 2
  %v2127 = vsel %vm2079, %v2126, %v2125
  %v2128 = vrot.slane %v2054, 1
  %v2129 = vsel %vm2082, %v2128, %v2127
  %v2131 = vpack.c.bf16 %v2083, %v2083
  %v2132 = vpack.c.bf16 %v2106, %v2106
  %v2133 = vpack.c.bf16 %v2129, %v2129
  %v2134 = vld [vmem:[%s7] sm:$0xf]
  %v2135 = vld [vmem:[%s7 + $0x4] sm:$0xf]
  %v2136 = vld [vmem:[%s7 + $0x8] sm:$0xf]
  %v2137 = vld [vmem:[%s7 + $0xc] sm:$0xf]
  %v2138 = vld [vmem:[%s7 + $0x10] sm:$0xf]
  %v2139 = vld [vmem:[%s7 + $0x14] sm:$0xf]
  %v2140 = vld [vmem:[%s7 + $0x18] sm:$0xf]
  %v2141 = vld [vmem:[%s7 + $0x1c] sm:$0xf]
  %v2142 = vld [vmem:[%s7 + $0x20] sm:$0xf]
  %v2143 = vld [vmem:[%s7 + $0x24] sm:$0xf]
  %v2144 = vld [vmem:[%s7 + $0x28] sm:$0xf]
  %v2145 = vld [vmem:[%s7 + $0x2c] sm:$0xf]
  %v2146 = vld [vmem:[%s7 + $0x30] sm:$0xf]
  %v2147 = vld [vmem:[%s7 + $0x34] sm:$0xf]
  %v2148 = vld [vmem:[%s7 + $0x38] sm:$0xf]
  %v2149 = vld [vmem:[%s7 + $0x3c] sm:$0xf]
  %v2150 = vld [vmem:[%s7 + $0x40] sm:$0xf]
  %v2151 = vld [vmem:[%s7 + $0x44] sm:$0xf]
  %v2152 = vld [vmem:[%s7 + $0x48] sm:$0xf]
  %v2153 = vld [vmem:[%s7 + $0x4c] sm:$0xf]
  %v2154 = vld [vmem:[%s7 + $0x50] sm:$0xf]
  %v2155 = vld [vmem:[%s7 + $0x54] sm:$0xf]
  %v2156 = vld [vmem:[%s7 + $0x58] sm:$0xf]
  %v2157 = vld [vmem:[%s7 + $0x5c] sm:$0xf]
  %v2158 = vld [vmem:[%s7 + $0x60] sm:$0xf]
  %v2159 = vld [vmem:[%s7 + $0x64] sm:$0xf]
  %v2160 = vld [vmem:[%s7 + $0x68] sm:$0xf]
  %v2161 = vld [vmem:[%s7 + $0x6c] sm:$0xf]
  %v2162 = vld [vmem:[%s7 + $0x70] sm:$0xf]
  %v2163 = vld [vmem:[%s7 + $0x74] sm:$0xf]
  %v2164 = vld [vmem:[%s7 + $0x78] sm:$0xf]
  %v2165 = vld [vmem:[%s7 + $0x7c] sm:$0xf]
  %v2166 = vld [vmem:[%s7 + $0x80] sm:$0xf]
  %v2167 = vld [vmem:[%s7 + $0x84] sm:$0xf]
  %v2168 = vld [vmem:[%s7 + $0x88] sm:$0xf]
  %v2169 = vld [vmem:[%s7 + $0x8c] sm:$0xf]
  %v2170 = vld [vmem:[%s7 + $0x90] sm:$0xf]
  %v2171 = vld [vmem:[%s7 + $0x94] sm:$0xf]
  %v2172 = vld [vmem:[%s7 + $0x98] sm:$0xf]
  %v2173 = vld [vmem:[%s7 + $0x9c] sm:$0xf]
  %v2174 = vld [vmem:[%s7 + $0xa0] sm:$0xf]
  %v2175 = vld [vmem:[%s7 + $0xa4] sm:$0xf]
  %v2176 = vld [vmem:[%s7 + $0xa8] sm:$0xf]
  %v2177 = vld [vmem:[%s7 + $0xac] sm:$0xf]
  %v2178 = vld [vmem:[%s7 + $0xb0] sm:$0xf]
  %v2179 = vld [vmem:[%s7 + $0xb4] sm:$0xf]
  %v2180 = vld [vmem:[%s7 + $0xb8] sm:$0xf]
  %v2181 = vld [vmem:[%s7 + $0xbc] sm:$0xf]
  %v2182 = vld [vmem:[%s8] sm:$0x1]
  %v2184 = vperm.slane %v2182, 0
  %v2234 = vunpack.c.l.b16 %v2134
  %v2235 = vunpack.c.l.b16 %v2135
  %v2236 = vunpack.c.l.b16 %v2136
  %v2237 = vunpack.c.l.b16 %v2137
  %v2238 = vunpack.c.l.b16 %v2138
  %v2239 = vunpack.c.l.b16 %v2139
  %v2240 = vunpack.c.l.b16 %v2140
  %v2241 = vunpack.c.l.b16 %v2141
  %v2242 = vunpack.c.l.b16 %v2142
  %v2243 = vunpack.c.l.b16 %v2143
  %v2244 = vunpack.c.l.b16 %v2144
  %v2245 = vunpack.c.l.b16 %v2145
  %v2246 = vunpack.c.l.b16 %v2146
  %v2247 = vunpack.c.l.b16 %v2147
  %v2248 = vunpack.c.l.b16 %v2148
  %v2249 = vunpack.c.l.b16 %v2149
  %v2250 = vunpack.c.l.b16 %v2150
  %v2251 = vunpack.c.l.b16 %v2151
  %v2252 = vunpack.c.l.b16 %v2152
  %v2253 = vunpack.c.l.b16 %v2153
  %v2254 = vunpack.c.l.b16 %v2154
  %v2255 = vunpack.c.l.b16 %v2155
  %v2256 = vunpack.c.l.b16 %v2156
  %v2257 = vunpack.c.l.b16 %v2157
  %v2258 = vunpack.c.l.b16 %v2158
  %v2259 = vunpack.c.l.b16 %v2159
  %v2260 = vunpack.c.l.b16 %v2160
  %v2261 = vunpack.c.l.b16 %v2161
  %v2262 = vunpack.c.l.b16 %v2162
  %v2263 = vunpack.c.l.b16 %v2163
  %v2264 = vunpack.c.l.b16 %v2164
  %v2265 = vunpack.c.l.b16 %v2165
  %v2266 = vunpack.c.l.b16 %v2166
  %v2267 = vunpack.c.l.b16 %v2167
  %v2268 = vunpack.c.l.b16 %v2168
  %v2269 = vunpack.c.l.b16 %v2169
  %v2270 = vunpack.c.l.b16 %v2170
  %v2271 = vunpack.c.l.b16 %v2171
  %v2272 = vunpack.c.l.b16 %v2172
  %v2273 = vunpack.c.l.b16 %v2173
  %v2274 = vunpack.c.l.b16 %v2174
  %v2275 = vunpack.c.l.b16 %v2175
  %v2276 = vunpack.c.l.b16 %v2176
  %v2277 = vunpack.c.l.b16 %v2177
  %v2278 = vunpack.c.l.b16 %v2178
  %v2279 = vunpack.c.l.b16 %v2179
  %v2280 = vunpack.c.l.b16 %v2180
  %v2281 = vunpack.c.l.b16 %v2181
  %v2282 = vpack.c.b16 %v2235, %v2234
  %v2283 = vpack.c.b16 %v2237, %v2236
  %v2284 = vpack.c.b16 %v2239, %v2238
  %v2285 = vpack.c.b16 %v2241, %v2240
  %v2286 = vpack.c.b16 %v2243, %v2242
  %v2287 = vpack.c.b16 %v2245, %v2244
  %v2288 = vpack.c.b16 %v2247, %v2246
  %v2289 = vpack.c.b16 %v2249, %v2248
  %v2290 = vpack.c.b16 %v2251, %v2250
  %v2291 = vpack.c.b16 %v2253, %v2252
  %v2292 = vpack.c.b16 %v2255, %v2254
  %v2293 = vpack.c.b16 %v2257, %v2256
  %v2294 = vpack.c.b16 %v2259, %v2258
  %v2295 = vpack.c.b16 %v2261, %v2260
  %v2296 = vpack.c.b16 %v2263, %v2262
  %v2297 = vpack.c.b16 %v2265, %v2264
  %v2298 = vpack.c.b16 %v2267, %v2266
  %v2299 = vpack.c.b16 %v2269, %v2268
  %v2300 = vpack.c.b16 %v2271, %v2270
  %v2301 = vpack.c.b16 %v2273, %v2272
  %v2302 = vpack.c.b16 %v2275, %v2274
  %v2303 = vpack.c.b16 %v2277, %v2276
  %v2304 = vpack.c.b16 %v2279, %v2278
  %v2305 = vpack.c.b16 %v2281, %v2280
  %2330 = vmatpush.bf16.msra.mxu0 %v2289
  %2331 = vmatpush.bf16.msra.mxu0 %v2288
  %2332 = vmatpush.bf16.msra.mxu0 %v2287
  %2333 = vmatpush.bf16.msra.mxu0 %v2286
  %2334 = vmatpush.bf16.msra.mxu0 %v2285
  %2335 = vmatpush.bf16.msra.mxu0 %v2284
  %2336 = vmatpush.bf16.msra.mxu0 %v2283
  %2337 = vmatpush.bf16.msra.mxu0 %v2282
  %2338 = vmatmul.bf16.gmra.mxu0 %v2131
  %v2339 = vpop.f32.mrf.mxu0
  %v2340 = vadd.f32 %v2184, %v2339
  %v2341 = vpop.f32.mrf.mxu0
  %2342 = vdwg.mxu0
  %2343 = vmatpush.bf16.msra.mxu0 %v2297
  %2344 = vmatpush.bf16.msra.mxu0 %v2296
  %2345 = vmatpush.bf16.msra.mxu0 %v2295
  %2346 = vmatpush.bf16.msra.mxu0 %v2294
  %2347 = vmatpush.bf16.msra.mxu0 %v2293
  %2348 = vmatpush.bf16.msra.mxu0 %v2292
  %2349 = vmatpush.bf16.msra.mxu0 %v2291
  %2350 = vmatpush.bf16.msra.mxu0 %v2290
  %2351 = vmatmul.bf16.gmra.mxu0 %v2132
  %v2352 = vpop.f32.mrf.mxu0
  %v2353 = vadd.f32 %v2340, %v2352
  %v2354 = vpop.f32.mrf.mxu0
  %2355 = vdwg.mxu0
  %2356 = vmatpush.bf16.msra.mxu0 %v2305
  %2357 = vmatpush.bf16.msra.mxu0 %v2304
  %2358 = vmatpush.bf16.msra.mxu0 %v2303
  %2359 = vmatpush.bf16.msra.mxu0 %v2302
  %2360 = vmatpush.bf16.msra.mxu0 %v2301
  %2361 = vmatpush.bf16.msra.mxu0 %v2300
  %2362 = vmatpush.bf16.msra.mxu0 %v2299
  %2363 = vmatpush.bf16.msra.mxu0 %v2298
  %2364 = vmatmul.bf16.gmra.mxu0 %v2133
  %v2365 = vpop.f32.mrf.mxu0
  %v2366 = vadd.f32 %v2353, %v2365
  %v2367 = vpop.f32.mrf.mxu0
  %2368 = vdwg.mxu0
  %2369 = vst [vmem:[%s9] sm:$0xff] %v2366
  // Predicated region
  $region38: #{textcnn_forward.1} parent=0 // pred_check
    _
  $region39: #{textcnn_forward.1} parent=0 // pred_check_branch
    %2371 = sbr.rel (0) target = $region41
  $region40: #{textcnn_forward.1} parent=0 // pred_region
    _
  $region41: #{textcnn_forward.1} parent=0 // pred_fallthru
    _
  // Predicated region
  $region42: #{textcnn_forward.1} parent=0 // pred_check
    _
  $region43: #{textcnn_forward.1} parent=0 // pred_check_branch
    %2373 = sbr.rel (0) target = $region45
  $region44: #{textcnn_forward.1} parent=0 // pred_region
    _
  $region45: #{textcnn_forward.1} parent=0 // pred_fallthru
    _

</llo_original>
